<compile_context>
chip_gen: v7x
topology: tpu7x:2x2x1
jax: 0.10.0
libtpu: 0.0.40
codegen_flags: <defaults>
</compile_context>

<pallas_src>
import functools
import math

import numpy as np
import jax
import jax.numpy as jnp
from jax import lax
from jax.experimental import pallas as pl
from jax.experimental.pallas import tpu as pltpu


def _tree_sum(terms):
    """Balanced pairwise sum (keeps the accumulation chain log-depth)."""
    terms = list(terms)
    while len(terms) > 1:
        nxt = [terms[i] + terms[i + 1] for i in range(0, len(terms) - 1, 2)]
        if len(terms) % 2:
            nxt.append(terms[-1])
        terms = nxt
    return terms[0]


def cbam_kernel(x_ref, w1_ref, w2_ref, wsp_ref, o_ref, *, H, W, K):
    """One batch element per grid step; everything in flat (C, H*W) layout.

    x_ref   : (1, C, H*W)  VMEM   (lane-dense: H*W in lanes)
    w1_ref  : (Cmid, C)    VMEM   fc1 weight (original orientation)
    w2_ref  : (C, Cmid)    VMEM   fc2 weight (original orientation)
    wsp_ref : (2, K*K)     VMEM   7x7 spatial conv weight, rows = [avg, max]
    o_ref   : (1, C, H*W)  VMEM
    """
    x = x_ref[0].astype(jnp.float32)                  # (C, HW)
    C, HW = x.shape
    P = (K - 1) // 2
    PADL = P * W + P                                  # flat pad so slice offset = dy*W + dx

    # ---------------- channel attention (fused avg/max MLP) ----------------
    avg_c = jnp.sum(x, axis=1, keepdims=True) * (1.0 / float(HW))   # (C, 1)
    max_c = jnp.max(x, axis=1, keepdims=True)                       # (C, 1)
    stats = jnp.concatenate([avg_c, max_c], axis=1)                 # (C, 2)

    h = jnp.dot(w1_ref[...], stats, preferred_element_type=jnp.float32)   # (Cmid, 2)
    h = jnp.maximum(h, 0.0)
    mlp = jnp.dot(w2_ref[...], h, preferred_element_type=jnp.float32)     # (C, 2)
    ca = jax.nn.sigmoid(mlp[:, 0:1] + mlp[:, 1:2])                  # (C, 1)

    x1 = x * ca                                                     # (C, HW) lane-broadcast

    # ---------------- spatial attention ----------------
    avg_s = jnp.sum(x1, axis=0, keepdims=True) * (1.0 / float(C))   # (1, HW)
    max_s = jnp.max(x1, axis=0, keepdims=True)                      # (1, HW)
    planes = jnp.concatenate([avg_s, max_s], axis=0)                # (2, HW) rows=[avg,max]

    zpad = jnp.zeros((2, PADL), jnp.float32)
    padded = jnp.concatenate([zpad, planes, zpad], axis=1)          # (2, HW + 2*PADL)

    wall = wsp_ref[...].astype(jnp.float32)                         # (2, K*K)

    # column index of each output lane (for masking column-wrap in flat layout)
    idx = lax.broadcasted_iota(jnp.int32, (2, HW), 1)
    if (W & (W - 1)) == 0:
        col = jnp.bitwise_and(idx, W - 1)
    else:
        col = idx % W

    # 7x7 conv, 2->1 channels.  For output flat index i and tap (dy, dx) the
    # neighbor lives at padded[:, dy*W + dx + i]; row over/under-flow lands in
    # the zero pad, only column overflow needs an explicit mask (per dx).
    dx_parts = []
    for dx in range(K):
        terms = []
        for dy in range(K):
            off = dy * W + dx
            widx = dy * K + dx
            terms.append(padded[:, off:off + HW] * wall[:, widx:widx + 1])
        part = _tree_sum(terms)                                     # (2, HW)
        if dx != P:                                                 # center tap never wraps
            xin = col + (dx - P)
            ok = (xin >= 0) & (xin < W)
            part = jnp.where(ok, part, 0.0)
        dx_parts.append(part)

    conv2 = _tree_sum(dx_parts)                                     # (2, HW)
    conv = jnp.sum(conv2, axis=0, keepdims=True)                    # (1, HW) combine avg/max
    sa = jax.nn.sigmoid(conv)

    o_ref[0] = (x1 * sa).astype(o_ref.dtype)                        # sublane-broadcast of sa


@jax.jit
def cbam_pallas(x_nchw, w_fc1, w_fc2, w_sp):
    """x_nchw: (N, C, H, W); w_fc1: (Cmid, C); w_fc2: (C, Cmid); w_sp: (1, 2, K, K)."""
    N, C, H, W = x_nchw.shape
    Cmid = w_fc1.shape[0]
    K = w_sp.shape[-1]
    HW = H * W

    # Free, contiguous reshapes only — no NCHW<->NHWC transpose passes over HBM.
    x_flat = x_nchw.reshape(N, C, HW)
    w1 = w_fc1.astype(jnp.float32)                       # (Cmid, C)
    w2 = w_fc2.astype(jnp.float32)                       # (C, Cmid)
    wsp = w_sp.reshape(2, K * K).astype(jnp.float32)     # rows: [avg-plane, max-plane]

    itemsize = jnp.dtype(x_nchw.dtype).itemsize
    flops = int(N * (2 * C * HW                  # channel pooling
                     + 4 * C * Cmid * 2          # fused MLP matmuls
                     + 2 * C * HW                # spatial pooling
                     + 2 * 2 * K * K * HW        # 7x7 conv MACs (2 planes)
                     + 4 * C * HW))              # attention broadcasts / products
    transcendentals = int(N * (C + HW))          # sigmoids
    bytes_accessed = int(2 * N * C * HW * itemsize + 4 * (2 * Cmid * C + 2 * K * K))

    kernel = functools.partial(cbam_kernel, H=H, W=W, K=K)

    out_flat = pl.pallas_call(
        kernel,
        out_shape=jax.ShapeDtypeStruct((N, C, HW), x_nchw.dtype),
        grid_spec=pltpu.PrefetchScalarGridSpec(
            num_scalar_prefetch=0,
            grid=(N,),
            in_specs=[
                pl.BlockSpec((1, C, HW), lambda n: (n, 0, 0)),
                pl.BlockSpec((Cmid, C), lambda n: (0, 0)),
                pl.BlockSpec((C, Cmid), lambda n: (0, 0)),
                pl.BlockSpec((2, K * K), lambda n: (0, 0)),
            ],
            out_specs=pl.BlockSpec((1, C, HW), lambda n: (n, 0, 0)),
        ),
        compiler_params=pltpu.CompilerParams(
            dimension_semantics=("parallel",),           # batch elems independent (v7x 2 TCs)
            vmem_limit_bytes=32 * 1024 * 1024,
        ),
        cost_estimate=pl.CostEstimate(
            flops=flops,
            transcendentals=transcendentals,
            bytes_accessed=bytes_accessed,
        ),
    )(x_flat, w1, w2, wsp)

    return out_flat.reshape(N, C, H, W)


def cbam_reference(x, w_fc1, w_fc2, w_sp):
    """Pure-JAX reference matching the PyTorch CBAM.forward (NCHW)."""
    avg = jnp.mean(x, axis=(2, 3), keepdims=True)
    mx = jnp.max(x, axis=(2, 3), keepdims=True)

    def mlp(v):
        h = jnp.einsum('nchw,mc->nmhw', v, w_fc1)
        h = jnp.maximum(h, 0.0)
        return jnp.einsum('nmhw,cm->nchw', h, w_fc2)

    ca = jax.nn.sigmoid(mlp(avg) + mlp(mx))
    x1 = x * ca
    avg_s = jnp.mean(x1, axis=1, keepdims=True)
    max_s = jnp.max(x1, axis=1, keepdims=True)
    cat = jnp.concatenate([avg_s, max_s], axis=1)
    conv = jax.lax.conv_general_dilated(
        cat, w_sp, window_strides=(1, 1), padding=((3, 3), (3, 3)),
        dimension_numbers=('NCHW', 'OIHW', 'NCHW'))
    sa = jax.nn.sigmoid(conv)
    return x1 * sa


if __name__ == "__main__":
    key = jax.random.PRNGKey(0)
    N, C, H, W = 2, 32, 16, 16
    reduction, K = 16, 7
    Cmid = C // reduction          # = 2

    kx, k1, k2, k3 = jax.random.split(key, 4)
    x = jax.random.normal(kx, (N, C, H, W), jnp.float32)
    # deterministic synthetic weights (shapes from the module __init__; 1x1 convs squeezed)
    w_fc1 = jax.random.normal(k1, (Cmid, C), jnp.float32) * (1.0 / math.sqrt(C))
    w_fc2 = jax.random.normal(k2, (C, Cmid), jnp.float32) * (1.0 / math.sqrt(Cmid))
    w_sp = jax.random.normal(k3, (1, 2, K, K), jnp.float32) * (1.0 / math.sqrt(2 * K * K))

    out = jax.block_until_ready(cbam_pallas(x, w_fc1, w_fc2, w_sp))
    ref = jax.block_until_ready(cbam_reference(x, w_fc1, w_fc2, w_sp))
    np.testing.assert_allclose(np.asarray(out), np.asarray(ref), rtol=1e-4, atol=1e-5)
    print("KERNEL_OK")
</pallas_src>

<mosaic_0001>
module attributes {stable_mosaic.version = 11 : i64} {
  func.func @cbam_kernel(%arg0: i32, %arg1: memref<1x32x256xf32, #tpu.memory_space<vmem>>, %arg2: memref<2x32xf32, #tpu.memory_space<vmem>>, %arg3: memref<32x2xf32, #tpu.memory_space<vmem>>, %arg4: memref<2x49xf32, #tpu.memory_space<vmem>>, %arg5: memref<1x32x256xf32, #tpu.memory_space<vmem>>) attributes {dimension_semantics = [#tpu.dimension_semantics<parallel>], iteration_bounds = array<i64: 2>, scalar_prefetch = 0 : i64, scratch_operands = 0 : i64, tpu.core_type = #tpu.core_type<tc>, window_params = [{transform_indices = @transform_0, window_bounds = array<i64: 1, 32, 256>}, {pipeline_mode = #tpu.pipeline_mode<synchronous>, transform_indices = @transform_1, window_bounds = array<i64: 2, 32>}, {pipeline_mode = #tpu.pipeline_mode<synchronous>, transform_indices = @transform_2, window_bounds = array<i64: 32, 2>}, {pipeline_mode = #tpu.pipeline_mode<synchronous>, transform_indices = @transform_3, window_bounds = array<i64: 2, 49>}, {transform_indices = @transform_4, window_bounds = array<i64: 1, 32, 256>}]} {
    %c0 = arith.constant 0 : index
    %c0_0 = arith.constant 0 : index
    %c0_1 = arith.constant 0 : index
    %0 = vector.load %arg1[%c0, %c0_0, %c0_1] : memref<1x32x256xf32, #tpu.memory_space<vmem>>, vector<1x32x256xf32>
    %1 = vector.shape_cast %0 : vector<1x32x256xf32> to vector<32x256xf32>
    %cst = arith.constant dense<0.000000e+00> : vector<32xf32>
    %2 = vector.multi_reduction <add>, %1, %cst [1] : vector<32x256xf32> to vector<32xf32>
    %3 = vector.shape_cast %2 : vector<32xf32> to vector<32x1xf32>
    %cst_2 = arith.constant 3.906250e-03 : f32
    %4 = vector.broadcast %cst_2 : f32 to vector<32x1xf32>
    %5 = arith.mulf %3, %4 : vector<32x1xf32>
    %cst_3 = arith.constant dense<0xFF800000> : vector<32xf32>
    %6 = vector.multi_reduction <maximumf>, %1, %cst_3 [1] : vector<32x256xf32> to vector<32xf32>
    %7 = vector.shape_cast %6 : vector<32xf32> to vector<32x1xf32>
    %8 = tpu.concatenate %5, %7 in 1 : vector<32x1xf32>, vector<32x1xf32> -> vector<32x2xf32>
    %c0_4 = arith.constant 0 : index
    %c0_5 = arith.constant 0 : index
    %9 = vector.load %arg2[%c0_4, %c0_5] : memref<2x32xf32, #tpu.memory_space<vmem>>, vector<2x32xf32>
    %cst_6 = arith.constant dense<0.000000e+00> : vector<2x2xf32>
    %10 = tpu.matmul %9, %8, %cst_6 {dimension_numbers = #tpu.dot_dimension_numbers<[1], [0], [0], [1], [0, 0, 1, 1], [], []>} : vector<2x32xf32>, vector<32x2xf32>, vector<2x2xf32> -> vector<2x2xf32>
    %cst_7 = arith.constant 0.000000e+00 : f32
    %11 = vector.broadcast %cst_7 : f32 to vector<2x2xf32>
    %12 = arith.maximumf %10, %11 : vector<2x2xf32>
    %c0_8 = arith.constant 0 : index
    %c0_9 = arith.constant 0 : index
    %13 = vector.load %arg3[%c0_8, %c0_9] : memref<32x2xf32, #tpu.memory_space<vmem>>, vector<32x2xf32>
    %cst_10 = arith.constant dense<0.000000e+00> : vector<32x2xf32>
    %14 = tpu.matmul %13, %12, %cst_10 {dimension_numbers = #tpu.dot_dimension_numbers<[1], [0], [0], [1], [0, 0, 1, 1], [], []>} : vector<32x2xf32>, vector<2x2xf32>, vector<32x2xf32> -> vector<32x2xf32>
    %15 = vector.extract_strided_slice %14 {offsets = [0, 0], sizes = [32, 1], strides = [1, 1]} : vector<32x2xf32> to vector<32x1xf32>
    %16 = vector.extract_strided_slice %14 {offsets = [0, 1], sizes = [32, 1], strides = [1, 1]} : vector<32x2xf32> to vector<32x1xf32>
    %17 = arith.addf %15, %16 : vector<32x1xf32>
    %18 = arith.negf %17 : vector<32x1xf32>
    %19 = math.exp %18 : vector<32x1xf32>
    %cst_11 = arith.constant 1.000000e+00 : f32
    %20 = vector.broadcast %cst_11 : f32 to vector<32x1xf32>
    %21 = arith.addf %20, %19 : vector<32x1xf32>
    %22 = arith.divf %20, %21 : vector<32x1xf32>
    %23 = vector.broadcast %22 : vector<32x1xf32> to vector<32x256xf32>
    %24 = arith.mulf %1, %23 : vector<32x256xf32>
    %cst_12 = arith.constant dense<0.000000e+00> : vector<256xf32>
    %25 = vector.multi_reduction <add>, %24, %cst_12 [0] : vector<32x256xf32> to vector<256xf32>
    %26 = vector.shape_cast %25 : vector<256xf32> to vector<1x256xf32>
    %cst_13 = arith.constant 3.125000e-02 : f32
    %27 = vector.broadcast %cst_13 : f32 to vector<1x256xf32>
    %28 = arith.mulf %26, %27 : vector<1x256xf32>
    %cst_14 = arith.constant dense<0xFF800000> : vector<256xf32>
    %29 = vector.multi_reduction <maximumf>, %24, %cst_14 [0] : vector<32x256xf32> to vector<256xf32>
    %30 = vector.shape_cast %29 : vector<256xf32> to vector<1x256xf32>
    %31 = tpu.concatenate %28, %30 in 0 : vector<1x256xf32>, vector<1x256xf32> -> vector<2x256xf32>
    %cst_15 = arith.constant 0.000000e+00 : f32
    %32 = vector.broadcast %cst_15 : f32 to vector<2x51xf32>
    %33 = tpu.concatenate %32, %31, %32 in 1 : vector<2x51xf32>, vector<2x256xf32>, vector<2x51xf32> -> vector<2x358xf32>
    %c0_16 = arith.constant 0 : index
    %c0_17 = arith.constant 0 : index
    %34 = vector.load %arg4[%c0_16, %c0_17] : memref<2x49xf32, #tpu.memory_space<vmem>>, vector<2x49xf32>
    %35 = tpu.iota {dimensions = array<i32: 1>} : vector<2x256xi32>
    %c15_i32 = arith.constant 15 : i32
    %36 = vector.broadcast %c15_i32 : i32 to vector<2x256xi32>
    %37 = arith.andi %35, %36 : vector<2x256xi32>
    %38 = vector.extract_strided_slice %33 {offsets = [0, 0], sizes = [2, 256], strides = [1, 1]} : vector<2x358xf32> to vector<2x256xf32>
    %39 = vector.extract_strided_slice %34 {offsets = [0, 0], sizes = [2, 1], strides = [1, 1]} : vector<2x49xf32> to vector<2x1xf32>
    %40 = vector.broadcast %39 : vector<2x1xf32> to vector<2x256xf32>
    %41 = arith.mulf %38, %40 : vector<2x256xf32>
    %42 = vector.extract_strided_slice %33 {offsets = [0, 16], sizes = [2, 256], strides = [1, 1]} : vector<2x358xf32> to vector<2x256xf32>
    %43 = vector.extract_strided_slice %34 {offsets = [0, 7], sizes = [2, 1], strides = [1, 1]} : vector<2x49xf32> to vector<2x1xf32>
    %44 = vector.broadcast %43 : vector<2x1xf32> to vector<2x256xf32>
    %45 = arith.mulf %42, %44 : vector<2x256xf32>
    %46 = vector.extract_strided_slice %33 {offsets = [0, 32], sizes = [2, 256], strides = [1, 1]} : vector<2x358xf32> to vector<2x256xf32>
    %47 = vector.extract_strided_slice %34 {offsets = [0, 14], sizes = [2, 1], strides = [1, 1]} : vector<2x49xf32> to vector<2x1xf32>
    %48 = vector.broadcast %47 : vector<2x1xf32> to vector<2x256xf32>
    %49 = arith.mulf %46, %48 : vector<2x256xf32>
    %50 = vector.extract_strided_slice %33 {offsets = [0, 48], sizes = [2, 256], strides = [1, 1]} : vector<2x358xf32> to vector<2x256xf32>
    %51 = vector.extract_strided_slice %34 {offsets = [0, 21], sizes = [2, 1], strides = [1, 1]} : vector<2x49xf32> to vector<2x1xf32>
    %52 = vector.broadcast %51 : vector<2x1xf32> to vector<2x256xf32>
    %53 = arith.mulf %50, %52 : vector<2x256xf32>
    %54 = vector.extract_strided_slice %33 {offsets = [0, 64], sizes = [2, 256], strides = [1, 1]} : vector<2x358xf32> to vector<2x256xf32>
    %55 = vector.extract_strided_slice %34 {offsets = [0, 28], sizes = [2, 1], strides = [1, 1]} : vector<2x49xf32> to vector<2x1xf32>
    %56 = vector.broadcast %55 : vector<2x1xf32> to vector<2x256xf32>
    %57 = arith.mulf %54, %56 : vector<2x256xf32>
    %58 = vector.extract_strided_slice %33 {offsets = [0, 80], sizes = [2, 256], strides = [1, 1]} : vector<2x358xf32> to vector<2x256xf32>
    %59 = vector.extract_strided_slice %34 {offsets = [0, 35], sizes = [2, 1], strides = [1, 1]} : vector<2x49xf32> to vector<2x1xf32>
    %60 = vector.broadcast %59 : vector<2x1xf32> to vector<2x256xf32>
    %61 = arith.mulf %58, %60 : vector<2x256xf32>
    %62 = vector.extract_strided_slice %33 {offsets = [0, 96], sizes = [2, 256], strides = [1, 1]} : vector<2x358xf32> to vector<2x256xf32>
    %63 = vector.extract_strided_slice %34 {offsets = [0, 42], sizes = [2, 1], strides = [1, 1]} : vector<2x49xf32> to vector<2x1xf32>
    %64 = vector.broadcast %63 : vector<2x1xf32> to vector<2x256xf32>
    %65 = arith.mulf %62, %64 : vector<2x256xf32>
    %66 = arith.addf %41, %45 : vector<2x256xf32>
    %67 = arith.addf %49, %53 : vector<2x256xf32>
    %68 = arith.addf %57, %61 : vector<2x256xf32>
    %69 = arith.addf %66, %67 : vector<2x256xf32>
    %70 = arith.addf %68, %65 : vector<2x256xf32>
    %71 = arith.addf %69, %70 : vector<2x256xf32>
    %c-3_i32 = arith.constant -3 : i32
    %72 = vector.broadcast %c-3_i32 : i32 to vector<2x256xi32>
    %73 = arith.addi %37, %72 : vector<2x256xi32>
    %c0_i32 = arith.constant 0 : i32
    %74 = vector.broadcast %c0_i32 : i32 to vector<2x256xi32>
    %75 = arith.cmpi sge, %73, %74 : vector<2x256xi32>
    %c16_i32 = arith.constant 16 : i32
    %76 = vector.broadcast %c16_i32 : i32 to vector<2x256xi32>
    %77 = arith.cmpi slt, %73, %76 : vector<2x256xi32>
    %78 = arith.andi %75, %77 : vector<2x256xi1>
    %cst_18 = arith.constant 0.000000e+00 : f32
    %79 = vector.broadcast %cst_18 : f32 to vector<2x256xf32>
    %80 = arith.select %78, %71, %79 : vector<2x256xi1>, vector<2x256xf32>
    %81 = vector.extract_strided_slice %33 {offsets = [0, 1], sizes = [2, 256], strides = [1, 1]} : vector<2x358xf32> to vector<2x256xf32>
    %82 = vector.extract_strided_slice %34 {offsets = [0, 1], sizes = [2, 1], strides = [1, 1]} : vector<2x49xf32> to vector<2x1xf32>
    %83 = vector.broadcast %82 : vector<2x1xf32> to vector<2x256xf32>
    %84 = arith.mulf %81, %83 : vector<2x256xf32>
    %85 = vector.extract_strided_slice %33 {offsets = [0, 17], sizes = [2, 256], strides = [1, 1]} : vector<2x358xf32> to vector<2x256xf32>
    %86 = vector.extract_strided_slice %34 {offsets = [0, 8], sizes = [2, 1], strides = [1, 1]} : vector<2x49xf32> to vector<2x1xf32>
    %87 = vector.broadcast %86 : vector<2x1xf32> to vector<2x256xf32>
    %88 = arith.mulf %85, %87 : vector<2x256xf32>
    %89 = vector.extract_strided_slice %33 {offsets = [0, 33], sizes = [2, 256], strides = [1, 1]} : vector<2x358xf32> to vector<2x256xf32>
    %90 = vector.extract_strided_slice %34 {offsets = [0, 15], sizes = [2, 1], strides = [1, 1]} : vector<2x49xf32> to vector<2x1xf32>
    %91 = vector.broadcast %90 : vector<2x1xf32> to vector<2x256xf32>
    %92 = arith.mulf %89, %91 : vector<2x256xf32>
    %93 = vector.extract_strided_slice %33 {offsets = [0, 49], sizes = [2, 256], strides = [1, 1]} : vector<2x358xf32> to vector<2x256xf32>
    %94 = vector.extract_strided_slice %34 {offsets = [0, 22], sizes = [2, 1], strides = [1, 1]} : vector<2x49xf32> to vector<2x1xf32>
    %95 = vector.broadcast %94 : vector<2x1xf32> to vector<2x256xf32>
    %96 = arith.mulf %93, %95 : vector<2x256xf32>
    %97 = vector.extract_strided_slice %33 {offsets = [0, 65], sizes = [2, 256], strides = [1, 1]} : vector<2x358xf32> to vector<2x256xf32>
    %98 = vector.extract_strided_slice %34 {offsets = [0, 29], sizes = [2, 1], strides = [1, 1]} : vector<2x49xf32> to vector<2x1xf32>
    %99 = vector.broadcast %98 : vector<2x1xf32> to vector<2x256xf32>
    %100 = arith.mulf %97, %99 : vector<2x256xf32>
    %101 = vector.extract_strided_slice %33 {offsets = [0, 81], sizes = [2, 256], strides = [1, 1]} : vector<2x358xf32> to vector<2x256xf32>
    %102 = vector.extract_strided_slice %34 {offsets = [0, 36], sizes = [2, 1], strides = [1, 1]} : vector<2x49xf32> to vector<2x1xf32>
    %103 = vector.broadcast %102 : vector<2x1xf32> to vector<2x256xf32>
    %104 = arith.mulf %101, %103 : vector<2x256xf32>
    %105 = vector.extract_strided_slice %33 {offsets = [0, 97], sizes = [2, 256], strides = [1, 1]} : vector<2x358xf32> to vector<2x256xf32>
    %106 = vector.extract_strided_slice %34 {offsets = [0, 43], sizes = [2, 1], strides = [1, 1]} : vector<2x49xf32> to vector<2x1xf32>
    %107 = vector.broadcast %106 : vector<2x1xf32> to vector<2x256xf32>
    %108 = arith.mulf %105, %107 : vector<2x256xf32>
    %109 = arith.addf %84, %88 : vector<2x256xf32>
    %110 = arith.addf %92, %96 : vector<2x256xf32>
    %111 = arith.addf %100, %104 : vector<2x256xf32>
    %112 = arith.addf %109, %110 : vector<2x256xf32>
    %113 = arith.addf %111, %108 : vector<2x256xf32>
    %114 = arith.addf %112, %113 : vector<2x256xf32>
    %c-2_i32 = arith.constant -2 : i32
    %115 = vector.broadcast %c-2_i32 : i32 to vector<2x256xi32>
    %116 = arith.addi %37, %115 : vector<2x256xi32>
    %c0_i32_19 = arith.constant 0 : i32
    %117 = vector.broadcast %c0_i32_19 : i32 to vector<2x256xi32>
    %118 = arith.cmpi sge, %116, %117 : vector<2x256xi32>
    %c16_i32_20 = arith.constant 16 : i32
    %119 = vector.broadcast %c16_i32_20 : i32 to vector<2x256xi32>
    %120 = arith.cmpi slt, %116, %119 : vector<2x256xi32>
    %121 = arith.andi %118, %120 : vector<2x256xi1>
    %cst_21 = arith.constant 0.000000e+00 : f32
    %122 = vector.broadcast %cst_21 : f32 to vector<2x256xf32>
    %123 = arith.select %121, %114, %122 : vector<2x256xi1>, vector<2x256xf32>
    %124 = vector.extract_strided_slice %33 {offsets = [0, 2], sizes = [2, 256], strides = [1, 1]} : vector<2x358xf32> to vector<2x256xf32>
    %125 = vector.extract_strided_slice %34 {offsets = [0, 2], sizes = [2, 1], strides = [1, 1]} : vector<2x49xf32> to vector<2x1xf32>
    %126 = vector.broadcast %125 : vector<2x1xf32> to vector<2x256xf32>
    %127 = arith.mulf %124, %126 : vector<2x256xf32>
    %128 = vector.extract_strided_slice %33 {offsets = [0, 18], sizes = [2, 256], strides = [1, 1]} : vector<2x358xf32> to vector<2x256xf32>
    %129 = vector.extract_strided_slice %34 {offsets = [0, 9], sizes = [2, 1], strides = [1, 1]} : vector<2x49xf32> to vector<2x1xf32>
    %130 = vector.broadcast %129 : vector<2x1xf32> to vector<2x256xf32>
    %131 = arith.mulf %128, %130 : vector<2x256xf32>
    %132 = vector.extract_strided_slice %33 {offsets = [0, 34], sizes = [2, 256], strides = [1, 1]} : vector<2x358xf32> to vector<2x256xf32>
    %133 = vector.extract_strided_slice %34 {offsets = [0, 16], sizes = [2, 1], strides = [1, 1]} : vector<2x49xf32> to vector<2x1xf32>
    %134 = vector.broadcast %133 : vector<2x1xf32> to vector<2x256xf32>
    %135 = arith.mulf %132, %134 : vector<2x256xf32>
    %136 = vector.extract_strided_slice %33 {offsets = [0, 50], sizes = [2, 256], strides = [1, 1]} : vector<2x358xf32> to vector<2x256xf32>
    %137 = vector.extract_strided_slice %34 {offsets = [0, 23], sizes = [2, 1], strides = [1, 1]} : vector<2x49xf32> to vector<2x1xf32>
    %138 = vector.broadcast %137 : vector<2x1xf32> to vector<2x256xf32>
    %139 = arith.mulf %136, %138 : vector<2x256xf32>
    %140 = vector.extract_strided_slice %33 {offsets = [0, 66], sizes = [2, 256], strides = [1, 1]} : vector<2x358xf32> to vector<2x256xf32>
    %141 = vector.extract_strided_slice %34 {offsets = [0, 30], sizes = [2, 1], strides = [1, 1]} : vector<2x49xf32> to vector<2x1xf32>
    %142 = vector.broadcast %141 : vector<2x1xf32> to vector<2x256xf32>
    %143 = arith.mulf %140, %142 : vector<2x256xf32>
    %144 = vector.extract_strided_slice %33 {offsets = [0, 82], sizes = [2, 256], strides = [1, 1]} : vector<2x358xf32> to vector<2x256xf32>
    %145 = vector.extract_strided_slice %34 {offsets = [0, 37], sizes = [2, 1], strides = [1, 1]} : vector<2x49xf32> to vector<2x1xf32>
    %146 = vector.broadcast %145 : vector<2x1xf32> to vector<2x256xf32>
    %147 = arith.mulf %144, %146 : vector<2x256xf32>
    %148 = vector.extract_strided_slice %33 {offsets = [0, 98], sizes = [2, 256], strides = [1, 1]} : vector<2x358xf32> to vector<2x256xf32>
    %149 = vector.extract_strided_slice %34 {offsets = [0, 44], sizes = [2, 1], strides = [1, 1]} : vector<2x49xf32> to vector<2x1xf32>
    %150 = vector.broadcast %149 : vector<2x1xf32> to vector<2x256xf32>
    %151 = arith.mulf %148, %150 : vector<2x256xf32>
    %152 = arith.addf %127, %131 : vector<2x256xf32>
    %153 = arith.addf %135, %139 : vector<2x256xf32>
    %154 = arith.addf %143, %147 : vector<2x256xf32>
    %155 = arith.addf %152, %153 : vector<2x256xf32>
    %156 = arith.addf %154, %151 : vector<2x256xf32>
    %157 = arith.addf %155, %156 : vector<2x256xf32>
    %c-1_i32 = arith.constant -1 : i32
    %158 = vector.broadcast %c-1_i32 : i32 to vector<2x256xi32>
    %159 = arith.addi %37, %158 : vector<2x256xi32>
    %c0_i32_22 = arith.constant 0 : i32
    %160 = vector.broadcast %c0_i32_22 : i32 to vector<2x256xi32>
    %161 = arith.cmpi sge, %159, %160 : vector<2x256xi32>
    %c16_i32_23 = arith.constant 16 : i32
    %162 = vector.broadcast %c16_i32_23 : i32 to vector<2x256xi32>
    %163 = arith.cmpi slt, %159, %162 : vector<2x256xi32>
    %164 = arith.andi %161, %163 : vector<2x256xi1>
    %cst_24 = arith.constant 0.000000e+00 : f32
    %165 = vector.broadcast %cst_24 : f32 to vector<2x256xf32>
    %166 = arith.select %164, %157, %165 : vector<2x256xi1>, vector<2x256xf32>
    %167 = vector.extract_strided_slice %33 {offsets = [0, 3], sizes = [2, 256], strides = [1, 1]} : vector<2x358xf32> to vector<2x256xf32>
    %168 = vector.extract_strided_slice %34 {offsets = [0, 3], sizes = [2, 1], strides = [1, 1]} : vector<2x49xf32> to vector<2x1xf32>
    %169 = vector.broadcast %168 : vector<2x1xf32> to vector<2x256xf32>
    %170 = arith.mulf %167, %169 : vector<2x256xf32>
    %171 = vector.extract_strided_slice %33 {offsets = [0, 19], sizes = [2, 256], strides = [1, 1]} : vector<2x358xf32> to vector<2x256xf32>
    %172 = vector.extract_strided_slice %34 {offsets = [0, 10], sizes = [2, 1], strides = [1, 1]} : vector<2x49xf32> to vector<2x1xf32>
    %173 = vector.broadcast %172 : vector<2x1xf32> to vector<2x256xf32>
    %174 = arith.mulf %171, %173 : vector<2x256xf32>
    %175 = vector.extract_strided_slice %33 {offsets = [0, 35], sizes = [2, 256], strides = [1, 1]} : vector<2x358xf32> to vector<2x256xf32>
    %176 = vector.extract_strided_slice %34 {offsets = [0, 17], sizes = [2, 1], strides = [1, 1]} : vector<2x49xf32> to vector<2x1xf32>
    %177 = vector.broadcast %176 : vector<2x1xf32> to vector<2x256xf32>
    %178 = arith.mulf %175, %177 : vector<2x256xf32>
    %179 = vector.extract_strided_slice %33 {offsets = [0, 51], sizes = [2, 256], strides = [1, 1]} : vector<2x358xf32> to vector<2x256xf32>
    %180 = vector.extract_strided_slice %34 {offsets = [0, 24], sizes = [2, 1], strides = [1, 1]} : vector<2x49xf32> to vector<2x1xf32>
    %181 = vector.broadcast %180 : vector<2x1xf32> to vector<2x256xf32>
    %182 = arith.mulf %179, %181 : vector<2x256xf32>
    %183 = vector.extract_strided_slice %33 {offsets = [0, 67], sizes = [2, 256], strides = [1, 1]} : vector<2x358xf32> to vector<2x256xf32>
    %184 = vector.extract_strided_slice %34 {offsets = [0, 31], sizes = [2, 1], strides = [1, 1]} : vector<2x49xf32> to vector<2x1xf32>
    %185 = vector.broadcast %184 : vector<2x1xf32> to vector<2x256xf32>
    %186 = arith.mulf %183, %185 : vector<2x256xf32>
    %187 = vector.extract_strided_slice %33 {offsets = [0, 83], sizes = [2, 256], strides = [1, 1]} : vector<2x358xf32> to vector<2x256xf32>
    %188 = vector.extract_strided_slice %34 {offsets = [0, 38], sizes = [2, 1], strides = [1, 1]} : vector<2x49xf32> to vector<2x1xf32>
    %189 = vector.broadcast %188 : vector<2x1xf32> to vector<2x256xf32>
    %190 = arith.mulf %187, %189 : vector<2x256xf32>
    %191 = vector.extract_strided_slice %33 {offsets = [0, 99], sizes = [2, 256], strides = [1, 1]} : vector<2x358xf32> to vector<2x256xf32>
    %192 = vector.extract_strided_slice %34 {offsets = [0, 45], sizes = [2, 1], strides = [1, 1]} : vector<2x49xf32> to vector<2x1xf32>
    %193 = vector.broadcast %192 : vector<2x1xf32> to vector<2x256xf32>
    %194 = arith.mulf %191, %193 : vector<2x256xf32>
    %195 = arith.addf %170, %174 : vector<2x256xf32>
    %196 = arith.addf %178, %182 : vector<2x256xf32>
    %197 = arith.addf %186, %190 : vector<2x256xf32>
    %198 = arith.addf %195, %196 : vector<2x256xf32>
    %199 = arith.addf %197, %194 : vector<2x256xf32>
    %200 = arith.addf %198, %199 : vector<2x256xf32>
    %201 = vector.extract_strided_slice %33 {offsets = [0, 4], sizes = [2, 256], strides = [1, 1]} : vector<2x358xf32> to vector<2x256xf32>
    %202 = vector.extract_strided_slice %34 {offsets = [0, 4], sizes = [2, 1], strides = [1, 1]} : vector<2x49xf32> to vector<2x1xf32>
    %203 = vector.broadcast %202 : vector<2x1xf32> to vector<2x256xf32>
    %204 = arith.mulf %201, %203 : vector<2x256xf32>
    %205 = vector.extract_strided_slice %33 {offsets = [0, 20], sizes = [2, 256], strides = [1, 1]} : vector<2x358xf32> to vector<2x256xf32>
    %206 = vector.extract_strided_slice %34 {offsets = [0, 11], sizes = [2, 1], strides = [1, 1]} : vector<2x49xf32> to vector<2x1xf32>
    %207 = vector.broadcast %206 : vector<2x1xf32> to vector<2x256xf32>
    %208 = arith.mulf %205, %207 : vector<2x256xf32>
    %209 = vector.extract_strided_slice %33 {offsets = [0, 36], sizes = [2, 256], strides = [1, 1]} : vector<2x358xf32> to vector<2x256xf32>
    %210 = vector.extract_strided_slice %34 {offsets = [0, 18], sizes = [2, 1], strides = [1, 1]} : vector<2x49xf32> to vector<2x1xf32>
    %211 = vector.broadcast %210 : vector<2x1xf32> to vector<2x256xf32>
    %212 = arith.mulf %209, %211 : vector<2x256xf32>
    %213 = vector.extract_strided_slice %33 {offsets = [0, 52], sizes = [2, 256], strides = [1, 1]} : vector<2x358xf32> to vector<2x256xf32>
    %214 = vector.extract_strided_slice %34 {offsets = [0, 25], sizes = [2, 1], strides = [1, 1]} : vector<2x49xf32> to vector<2x1xf32>
    %215 = vector.broadcast %214 : vector<2x1xf32> to vector<2x256xf32>
    %216 = arith.mulf %213, %215 : vector<2x256xf32>
    %217 = vector.extract_strided_slice %33 {offsets = [0, 68], sizes = [2, 256], strides = [1, 1]} : vector<2x358xf32> to vector<2x256xf32>
    %218 = vector.extract_strided_slice %34 {offsets = [0, 32], sizes = [2, 1], strides = [1, 1]} : vector<2x49xf32> to vector<2x1xf32>
    %219 = vector.broadcast %218 : vector<2x1xf32> to vector<2x256xf32>
    %220 = arith.mulf %217, %219 : vector<2x256xf32>
    %221 = vector.extract_strided_slice %33 {offsets = [0, 84], sizes = [2, 256], strides = [1, 1]} : vector<2x358xf32> to vector<2x256xf32>
    %222 = vector.extract_strided_slice %34 {offsets = [0, 39], sizes = [2, 1], strides = [1, 1]} : vector<2x49xf32> to vector<2x1xf32>
    %223 = vector.broadcast %222 : vector<2x1xf32> to vector<2x256xf32>
    %224 = arith.mulf %221, %223 : vector<2x256xf32>
    %225 = vector.extract_strided_slice %33 {offsets = [0, 100], sizes = [2, 256], strides = [1, 1]} : vector<2x358xf32> to vector<2x256xf32>
    %226 = vector.extract_strided_slice %34 {offsets = [0, 46], sizes = [2, 1], strides = [1, 1]} : vector<2x49xf32> to vector<2x1xf32>
    %227 = vector.broadcast %226 : vector<2x1xf32> to vector<2x256xf32>
    %228 = arith.mulf %225, %227 : vector<2x256xf32>
    %229 = arith.addf %204, %208 : vector<2x256xf32>
    %230 = arith.addf %212, %216 : vector<2x256xf32>
    %231 = arith.addf %220, %224 : vector<2x256xf32>
    %232 = arith.addf %229, %230 : vector<2x256xf32>
    %233 = arith.addf %231, %228 : vector<2x256xf32>
    %234 = arith.addf %232, %233 : vector<2x256xf32>
    %c1_i32 = arith.constant 1 : i32
    %235 = vector.broadcast %c1_i32 : i32 to vector<2x256xi32>
    %236 = arith.addi %37, %235 : vector<2x256xi32>
    %c0_i32_25 = arith.constant 0 : i32
    %237 = vector.broadcast %c0_i32_25 : i32 to vector<2x256xi32>
    %238 = arith.cmpi sge, %236, %237 : vector<2x256xi32>
    %c16_i32_26 = arith.constant 16 : i32
    %239 = vector.broadcast %c16_i32_26 : i32 to vector<2x256xi32>
    %240 = arith.cmpi slt, %236, %239 : vector<2x256xi32>
    %241 = arith.andi %238, %240 : vector<2x256xi1>
    %cst_27 = arith.constant 0.000000e+00 : f32
    %242 = vector.broadcast %cst_27 : f32 to vector<2x256xf32>
    %243 = arith.select %241, %234, %242 : vector<2x256xi1>, vector<2x256xf32>
    %244 = vector.extract_strided_slice %33 {offsets = [0, 5], sizes = [2, 256], strides = [1, 1]} : vector<2x358xf32> to vector<2x256xf32>
    %245 = vector.extract_strided_slice %34 {offsets = [0, 5], sizes = [2, 1], strides = [1, 1]} : vector<2x49xf32> to vector<2x1xf32>
    %246 = vector.broadcast %245 : vector<2x1xf32> to vector<2x256xf32>
    %247 = arith.mulf %244, %246 : vector<2x256xf32>
    %248 = vector.extract_strided_slice %33 {offsets = [0, 21], sizes = [2, 256], strides = [1, 1]} : vector<2x358xf32> to vector<2x256xf32>
    %249 = vector.extract_strided_slice %34 {offsets = [0, 12], sizes = [2, 1], strides = [1, 1]} : vector<2x49xf32> to vector<2x1xf32>
    %250 = vector.broadcast %249 : vector<2x1xf32> to vector<2x256xf32>
    %251 = arith.mulf %248, %250 : vector<2x256xf32>
    %252 = vector.extract_strided_slice %33 {offsets = [0, 37], sizes = [2, 256], strides = [1, 1]} : vector<2x358xf32> to vector<2x256xf32>
    %253 = vector.extract_strided_slice %34 {offsets = [0, 19], sizes = [2, 1], strides = [1, 1]} : vector<2x49xf32> to vector<2x1xf32>
    %254 = vector.broadcast %253 : vector<2x1xf32> to vector<2x256xf32>
    %255 = arith.mulf %252, %254 : vector<2x256xf32>
    %256 = vector.extract_strided_slice %33 {offsets = [0, 53], sizes = [2, 256], strides = [1, 1]} : vector<2x358xf32> to vector<2x256xf32>
    %257 = vector.extract_strided_slice %34 {offsets = [0, 26], sizes = [2, 1], strides = [1, 1]} : vector<2x49xf32> to vector<2x1xf32>
    %258 = vector.broadcast %257 : vector<2x1xf32> to vector<2x256xf32>
    %259 = arith.mulf %256, %258 : vector<2x256xf32>
    %260 = vector.extract_strided_slice %33 {offsets = [0, 69], sizes = [2, 256], strides = [1, 1]} : vector<2x358xf32> to vector<2x256xf32>
    %261 = vector.extract_strided_slice %34 {offsets = [0, 33], sizes = [2, 1], strides = [1, 1]} : vector<2x49xf32> to vector<2x1xf32>
    %262 = vector.broadcast %261 : vector<2x1xf32> to vector<2x256xf32>
    %263 = arith.mulf %260, %262 : vector<2x256xf32>
    %264 = vector.extract_strided_slice %33 {offsets = [0, 85], sizes = [2, 256], strides = [1, 1]} : vector<2x358xf32> to vector<2x256xf32>
    %265 = vector.extract_strided_slice %34 {offsets = [0, 40], sizes = [2, 1], strides = [1, 1]} : vector<2x49xf32> to vector<2x1xf32>
    %266 = vector.broadcast %265 : vector<2x1xf32> to vector<2x256xf32>
    %267 = arith.mulf %264, %266 : vector<2x256xf32>
    %268 = vector.extract_strided_slice %33 {offsets = [0, 101], sizes = [2, 256], strides = [1, 1]} : vector<2x358xf32> to vector<2x256xf32>
    %269 = vector.extract_strided_slice %34 {offsets = [0, 47], sizes = [2, 1], strides = [1, 1]} : vector<2x49xf32> to vector<2x1xf32>
    %270 = vector.broadcast %269 : vector<2x1xf32> to vector<2x256xf32>
    %271 = arith.mulf %268, %270 : vector<2x256xf32>
    %272 = arith.addf %247, %251 : vector<2x256xf32>
    %273 = arith.addf %255, %259 : vector<2x256xf32>
    %274 = arith.addf %263, %267 : vector<2x256xf32>
    %275 = arith.addf %272, %273 : vector<2x256xf32>
    %276 = arith.addf %274, %271 : vector<2x256xf32>
    %277 = arith.addf %275, %276 : vector<2x256xf32>
    %c2_i32 = arith.constant 2 : i32
    %278 = vector.broadcast %c2_i32 : i32 to vector<2x256xi32>
    %279 = arith.addi %37, %278 : vector<2x256xi32>
    %c0_i32_28 = arith.constant 0 : i32
    %280 = vector.broadcast %c0_i32_28 : i32 to vector<2x256xi32>
    %281 = arith.cmpi sge, %279, %280 : vector<2x256xi32>
    %c16_i32_29 = arith.constant 16 : i32
    %282 = vector.broadcast %c16_i32_29 : i32 to vector<2x256xi32>
    %283 = arith.cmpi slt, %279, %282 : vector<2x256xi32>
    %284 = arith.andi %281, %283 : vector<2x256xi1>
    %cst_30 = arith.constant 0.000000e+00 : f32
    %285 = vector.broadcast %cst_30 : f32 to vector<2x256xf32>
    %286 = arith.select %284, %277, %285 : vector<2x256xi1>, vector<2x256xf32>
    %287 = vector.extract_strided_slice %33 {offsets = [0, 6], sizes = [2, 256], strides = [1, 1]} : vector<2x358xf32> to vector<2x256xf32>
    %288 = vector.extract_strided_slice %34 {offsets = [0, 6], sizes = [2, 1], strides = [1, 1]} : vector<2x49xf32> to vector<2x1xf32>
    %289 = vector.broadcast %288 : vector<2x1xf32> to vector<2x256xf32>
    %290 = arith.mulf %287, %289 : vector<2x256xf32>
    %291 = vector.extract_strided_slice %33 {offsets = [0, 22], sizes = [2, 256], strides = [1, 1]} : vector<2x358xf32> to vector<2x256xf32>
    %292 = vector.extract_strided_slice %34 {offsets = [0, 13], sizes = [2, 1], strides = [1, 1]} : vector<2x49xf32> to vector<2x1xf32>
    %293 = vector.broadcast %292 : vector<2x1xf32> to vector<2x256xf32>
    %294 = arith.mulf %291, %293 : vector<2x256xf32>
    %295 = vector.extract_strided_slice %33 {offsets = [0, 38], sizes = [2, 256], strides = [1, 1]} : vector<2x358xf32> to vector<2x256xf32>
    %296 = vector.extract_strided_slice %34 {offsets = [0, 20], sizes = [2, 1], strides = [1, 1]} : vector<2x49xf32> to vector<2x1xf32>
    %297 = vector.broadcast %296 : vector<2x1xf32> to vector<2x256xf32>
    %298 = arith.mulf %295, %297 : vector<2x256xf32>
    %299 = vector.extract_strided_slice %33 {offsets = [0, 54], sizes = [2, 256], strides = [1, 1]} : vector<2x358xf32> to vector<2x256xf32>
    %300 = vector.extract_strided_slice %34 {offsets = [0, 27], sizes = [2, 1], strides = [1, 1]} : vector<2x49xf32> to vector<2x1xf32>
    %301 = vector.broadcast %300 : vector<2x1xf32> to vector<2x256xf32>
    %302 = arith.mulf %299, %301 : vector<2x256xf32>
    %303 = vector.extract_strided_slice %33 {offsets = [0, 70], sizes = [2, 256], strides = [1, 1]} : vector<2x358xf32> to vector<2x256xf32>
    %304 = vector.extract_strided_slice %34 {offsets = [0, 34], sizes = [2, 1], strides = [1, 1]} : vector<2x49xf32> to vector<2x1xf32>
    %305 = vector.broadcast %304 : vector<2x1xf32> to vector<2x256xf32>
    %306 = arith.mulf %303, %305 : vector<2x256xf32>
    %307 = vector.extract_strided_slice %33 {offsets = [0, 86], sizes = [2, 256], strides = [1, 1]} : vector<2x358xf32> to vector<2x256xf32>
    %308 = vector.extract_strided_slice %34 {offsets = [0, 41], sizes = [2, 1], strides = [1, 1]} : vector<2x49xf32> to vector<2x1xf32>
    %309 = vector.broadcast %308 : vector<2x1xf32> to vector<2x256xf32>
    %310 = arith.mulf %307, %309 : vector<2x256xf32>
    %311 = vector.extract_strided_slice %33 {offsets = [0, 102], sizes = [2, 256], strides = [1, 1]} : vector<2x358xf32> to vector<2x256xf32>
    %312 = vector.extract_strided_slice %34 {offsets = [0, 48], sizes = [2, 1], strides = [1, 1]} : vector<2x49xf32> to vector<2x1xf32>
    %313 = vector.broadcast %312 : vector<2x1xf32> to vector<2x256xf32>
    %314 = arith.mulf %311, %313 : vector<2x256xf32>
    %315 = arith.addf %290, %294 : vector<2x256xf32>
    %316 = arith.addf %298, %302 : vector<2x256xf32>
    %317 = arith.addf %306, %310 : vector<2x256xf32>
    %318 = arith.addf %315, %316 : vector<2x256xf32>
    %319 = arith.addf %317, %314 : vector<2x256xf32>
    %320 = arith.addf %318, %319 : vector<2x256xf32>
    %c3_i32 = arith.constant 3 : i32
    %321 = vector.broadcast %c3_i32 : i32 to vector<2x256xi32>
    %322 = arith.addi %37, %321 : vector<2x256xi32>
    %c0_i32_31 = arith.constant 0 : i32
    %323 = vector.broadcast %c0_i32_31 : i32 to vector<2x256xi32>
    %324 = arith.cmpi sge, %322, %323 : vector<2x256xi32>
    %c16_i32_32 = arith.constant 16 : i32
    %325 = vector.broadcast %c16_i32_32 : i32 to vector<2x256xi32>
    %326 = arith.cmpi slt, %322, %325 : vector<2x256xi32>
    %327 = arith.andi %324, %326 : vector<2x256xi1>
    %cst_33 = arith.constant 0.000000e+00 : f32
    %328 = vector.broadcast %cst_33 : f32 to vector<2x256xf32>
    %329 = arith.select %327, %320, %328 : vector<2x256xi1>, vector<2x256xf32>
    %330 = arith.addf %80, %123 : vector<2x256xf32>
    %331 = arith.addf %166, %200 : vector<2x256xf32>
    %332 = arith.addf %243, %286 : vector<2x256xf32>
    %333 = arith.addf %330, %331 : vector<2x256xf32>
    %334 = arith.addf %332, %329 : vector<2x256xf32>
    %335 = arith.addf %333, %334 : vector<2x256xf32>
    %cst_34 = arith.constant dense<0.000000e+00> : vector<256xf32>
    %336 = vector.multi_reduction <add>, %335, %cst_34 [0] : vector<2x256xf32> to vector<256xf32>
    %337 = vector.shape_cast %336 : vector<256xf32> to vector<1x256xf32>
    %338 = arith.negf %337 : vector<1x256xf32>
    %339 = math.exp %338 : vector<1x256xf32>
    %cst_35 = arith.constant 1.000000e+00 : f32
    %340 = vector.broadcast %cst_35 : f32 to vector<1x256xf32>
    %341 = arith.addf %340, %339 : vector<1x256xf32>
    %342 = arith.divf %340, %341 : vector<1x256xf32>
    %343 = vector.broadcast %342 : vector<1x256xf32> to vector<32x256xf32>
    %344 = arith.mulf %24, %343 : vector<32x256xf32>
    %c0_36 = arith.constant 0 : index
    %c0_37 = arith.constant 0 : index
    %c0_38 = arith.constant 0 : index
    %345 = vector.load %arg5[%c0_36, %c0_37, %c0_38] : memref<1x32x256xf32, #tpu.memory_space<vmem>>, vector<1x32x256xf32>
    %346 = vector.shape_cast %345 : vector<1x32x256xf32> to vector<32x256xf32>
    %347 = vector.shape_cast %344 : vector<32x256xf32> to vector<1x32x256xf32>
    tpu.vector_store %arg5[%c0_36, %c0_37, %c0_38], %347 {strides = array<i32>} : memref<1x32x256xf32, #tpu.memory_space<vmem>>, vector<1x32x256xf32>,
    return
  }
  func.func @transform_0(%arg0: i32) -> (i32, i32, i32) {
    %c0_i32 = arith.constant 0 : i32
    %c0_i32_0 = arith.constant 0 : i32
    %c0_i32_1 = arith.constant 0 : i32
    return %arg0, %c0_i32, %c0_i32_0 : i32, i32, i32
  }
  func.func @transform_1(%arg0: i32) -> (i32, i32) {
    %c0_i32 = arith.constant 0 : i32
    %c0_i32_0 = arith.constant 0 : i32
    %c0_i32_1 = arith.constant 0 : i32
    return %c0_i32, %c0_i32_0 : i32, i32
  }
  func.func @transform_2(%arg0: i32) -> (i32, i32) {
    %c0_i32 = arith.constant 0 : i32
    %c0_i32_0 = arith.constant 0 : i32
    %c0_i32_1 = arith.constant 0 : i32
    return %c0_i32, %c0_i32_0 : i32, i32
  }
  func.func @transform_3(%arg0: i32) -> (i32, i32) {
    %c0_i32 = arith.constant 0 : i32
    %c0_i32_0 = arith.constant 0 : i32
    %c0_i32_1 = arith.constant 0 : i32
    return %c0_i32, %c0_i32_0 : i32, i32
  }
  func.func @transform_4(%arg0: i32) -> (i32, i32, i32) {
    %c0_i32 = arith.constant 0 : i32
    %c0_i32_0 = arith.constant 0 : i32
    %c0_i32_1 = arith.constant 0 : i32
    return %arg0, %c0_i32, %c0_i32_0 : i32, i32, i32
  }
}

</mosaic_0001>

<llo_original>
// kernel: cbam_pallas.1
$region0: #{cbam_pallas.1}
  #allocation0 [shape = 'u32[]', space=smem, size = 0x4, offset = 0x4, fixed_abs, tag = 'smem constant byte address 0x4 - core index']
  #allocation1 [shape = 'u32[144,128]{1,0:T(1,128)}', space=vmem, size = 0x12000, scoped, tag = 'internal scratch']
  %s0 = inlined_call_operand.vmem [shape: f32[2,32,256], index: 0, kind: input, shape index: {}]
  %s1 = inlined_call_operand.vmem [shape: f32[2,32], index: 1, kind: input, shape index: {}]
  %s2 = inlined_call_operand.vmem [shape: f32[32,2], index: 2, kind: input, shape index: {}]
  %s3 = inlined_call_operand.vmem [shape: f32[2,49], index: 3, kind: input, shape index: {}]
  %s4 = inlined_call_operand.vmem [shape: f32[2,32,256], index: 4, kind: output, shape index: {}]
  %s5 = sld [smem:[#allocation0]]
  $region49: #{cbam_pallas.1} parent=0
    _
  %s7 = ssub.s32 1, %s5
  %s8 = scalar_select 0, %s7, %s5
  loop: start=0, step=1, limit=4
  $region2: #{cbam_pallas.1} parent=0 // loop_pre_header
    _
  $region3: #{cbam_pallas.1} parent=0 // loop_header
    %s10 = sphi 0, %s14
    %p11 = scmp.ge.s32.totalorder %s10, 4
    %s20 = sphi 0, %s22
    %s23 = sphi 0, %s20
    %s24 = sphi 0, %s23
    %s40 = sphi 0, %s24
    %s44 = sphi 0, %s44
    %s46 = sphi 0, %s44
    %s47 = sphi 0, %s46
    %s61 = sphi 0, %s47
    %s65 = sphi 0, %s65
    %s67 = sphi 0, %s65
    %s68 = sphi 0, %s67
    %s82 = sphi 0, %s68
    %s86 = sphi 0, %s86
    %s88 = sphi 0, %s86
    %s89 = sphi 0, %s88
    %s103 = sphi 0, %s89
    %s109 = sphi 0, %s111
    %s112 = sphi 0, %s109
    %s113 = sphi 0, %s112
    %s129 = sphi 0, %s113
  $region4: #{cbam_pallas.1} parent=0 // loop_header_branch
    %13 = sbr.rel (%p11) target = $region8
  $region5: #{cbam_pallas.1} parent=0 // loop_body
    %s15 = ssub.s32 %s10, 1
    %s16 = ssub.s32 %s10, 2
    %s17 = sadd.s32 %s10, 1
    %s18 = ssub.s32 %s10, %s17
    %p19 = scmp.eq.s32.totalorder %s18, 0
    %s21 = sadd.s32 %s20, 1
    %s22 = scalar_select %p19, %s20, %s21
    %p25 = pneg %p19
    %p26 = scmp.eq.s32.totalorder %s10, 1
    %p27 = por %p25, %p26
    %p28 = scmp.ne.s32.totalorder %s20, %s23
    %p29 = scmp.eq.s32.totalorder %s10, 0
    %p30 = por %p28, %p29
    %p31 = scmp.ne.s32.totalorder %s20, %s23
    %p32 = scmp.eq.s32.totalorder %s15, 1
    %p33 = por %p31, %p32
    %p34 = scmp.ne.s32.totalorder %s23, %s24
    %p35 = scmp.eq.s32.totalorder %s15, 0
    %p36 = por %p34, %p35
    %p37 = scmp.ne.s32.totalorder %s23, %s24
    %p38 = scmp.eq.s32.totalorder %s16, 1
    %p39 = por %p37, %p38
    %p41 = scmp.ne.s32.totalorder %s24, %s40
    %p42 = scmp.eq.s32.totalorder %s16, 0
    %p43 = por %p41, %p42
    %s45 = sadd.s32 %s44, 1
    %p48 = scmp.eq.s32.totalorder %s10, 1
    %p49 = scmp.ne.s32.totalorder %s44, %s46
    %p50 = scmp.eq.s32.totalorder %s10, 0
    %p51 = por %p49, %p50
    %p52 = scmp.ne.s32.totalorder %s44, %s46
    %p53 = scmp.eq.s32.totalorder %s15, 1
    %p54 = por %p52, %p53
    %p55 = scmp.ne.s32.totalorder %s46, %s47
    %p56 = scmp.eq.s32.totalorder %s15, 0
    %p57 = por %p55, %p56
    %p58 = scmp.ne.s32.totalorder %s46, %s47
    %p59 = scmp.eq.s32.totalorder %s16, 1
    %p60 = por %p58, %p59
    %p62 = scmp.ne.s32.totalorder %s47, %s61
    %p63 = scmp.eq.s32.totalorder %s16, 0
    %p64 = por %p62, %p63
    %s66 = sadd.s32 %s65, 1
    %p69 = scmp.eq.s32.totalorder %s10, 1
    %p70 = scmp.ne.s32.totalorder %s65, %s67
    %p71 = scmp.eq.s32.totalorder %s10, 0
    %p72 = por %p70, %p71
    %p73 = scmp.ne.s32.totalorder %s65, %s67
    %p74 = scmp.eq.s32.totalorder %s15, 1
    %p75 = por %p73, %p74
    %p76 = scmp.ne.s32.totalorder %s67, %s68
    %p77 = scmp.eq.s32.totalorder %s15, 0
    %p78 = por %p76, %p77
    %p79 = scmp.ne.s32.totalorder %s67, %s68
    %p80 = scmp.eq.s32.totalorder %s16, 1
    %p81 = por %p79, %p80
    %p83 = scmp.ne.s32.totalorder %s68, %s82
    %p84 = scmp.eq.s32.totalorder %s16, 0
    %p85 = por %p83, %p84
    %s87 = sadd.s32 %s86, 1
    %p90 = scmp.eq.s32.totalorder %s10, 1
    %p91 = scmp.ne.s32.totalorder %s86, %s88
    %p92 = scmp.eq.s32.totalorder %s10, 0
    %p93 = por %p91, %p92
    %p94 = scmp.ne.s32.totalorder %s86, %s88
    %p95 = scmp.eq.s32.totalorder %s15, 1
    %p96 = por %p94, %p95
    %p97 = scmp.ne.s32.totalorder %s88, %s89
    %p98 = scmp.eq.s32.totalorder %s15, 0
    %p99 = por %p97, %p98
    %p100 = scmp.ne.s32.totalorder %s88, %s89
    %p101 = scmp.eq.s32.totalorder %s16, 1
    %p102 = por %p100, %p101
    %p104 = scmp.ne.s32.totalorder %s89, %s103
    %p105 = scmp.eq.s32.totalorder %s16, 0
    %p106 = por %p104, %p105
    %s107 = ssub.s32 %s10, %s17
    %p108 = scmp.eq.s32.totalorder %s107, 0
    %s110 = sadd.s32 %s109, 1
    %s111 = scalar_select %p108, %s109, %s110
    %p114 = pneg %p108
    %p115 = scmp.eq.s32.totalorder %s10, 1
    %p116 = por %p114, %p115
    %p117 = scmp.ne.s32.totalorder %s109, %s112
    %p118 = scmp.eq.s32.totalorder %s10, 0
    %p119 = por %p117, %p118
    %p120 = scmp.ne.s32.totalorder %s109, %s112
    %p121 = scmp.eq.s32.totalorder %s15, 1
    %p122 = por %p120, %p121
    %p123 = scmp.ne.s32.totalorder %s112, %s113
    %p124 = scmp.eq.s32.totalorder %s15, 0
    %p125 = por %p123, %p124
    %p126 = scmp.ne.s32.totalorder %s112, %s113
    %p127 = scmp.eq.s32.totalorder %s16, 1
    %p128 = por %p126, %p127
    %p130 = scmp.ne.s32.totalorder %s113, %s129
    %p131 = scmp.eq.s32.totalorder %s16, 0
    %p132 = por %p130, %p131
    %p133 = scmp.le.s32.totalorder 1, %s10
    %p134 = scmp.lt.s32.totalorder %s10, 3
    %p135 = pnand %p133, %p134
    %p136 = pneg %p135
    // Predicated region
    $region9: #{cbam_pallas.1} parent=5 // pred_check
      _
    $region10: #{cbam_pallas.1} parent=5 // pred_check_branch
      %138 = sbr.rel (%p135) target = $region12
    $region11: #{cbam_pallas.1} parent=5 // pred_region
      %s139 = ssub.s32 %s10, 1
      // Predicated region
      $region13: #{cbam_pallas.1} parent=11 // pred_check
        %p140 = pneg %p57
      $region14: #{cbam_pallas.1} parent=11 // pred_check_branch
        %142 = sbr.rel (%p140) target = $region16
      $region15: #{cbam_pallas.1} parent=11 // pred_region
        _
      $region16: #{cbam_pallas.1} parent=11 // pred_fallthru
        _
      // Predicated region
      $region17: #{cbam_pallas.1} parent=11 // pred_check
        %p143 = pneg %p78
      $region18: #{cbam_pallas.1} parent=11 // pred_check_branch
        %145 = sbr.rel (%p143) target = $region20
      $region19: #{cbam_pallas.1} parent=11 // pred_region
        _
      $region20: #{cbam_pallas.1} parent=11 // pred_fallthru
        _
      // Predicated region
      $region21: #{cbam_pallas.1} parent=11 // pred_check
        %p146 = pneg %p99
      $region22: #{cbam_pallas.1} parent=11 // pred_check_branch
        %148 = sbr.rel (%p146) target = $region24
      $region23: #{cbam_pallas.1} parent=11 // pred_region
        _
      $region24: #{cbam_pallas.1} parent=11 // pred_fallthru
        _
    $region12: #{cbam_pallas.1} parent=5 // pred_fallthru
      _
    %p149 = scmp.lt.s32.totalorder %s10, 2
    // Predicated region
    $region25: #{cbam_pallas.1} parent=5 // pred_check
      %p150 = pneg %p149
    $region26: #{cbam_pallas.1} parent=5 // pred_check_branch
      %152 = sbr.rel (%p150) target = $region28
    $region27: #{cbam_pallas.1} parent=5 // pred_region
      // Predicated region
      $region29: #{cbam_pallas.1} parent=27 // pred_check
        %p153 = pneg %p30
      $region30: #{cbam_pallas.1} parent=27 // pred_check_branch
        %155 = sbr.rel (%p153) target = $region32
      $region31: #{cbam_pallas.1} parent=27 // pred_region
        %p156 = scmp.lt.s32.totalorder %s10, 1
        %s157 = scalar_select %p156, %s10, 1
        %s158 = smul.addr %s157, 8
        %s159 = smul.addr %s158, 8
        %s160 = scalar_lea.vmem %s0, %s159
      $region32: #{cbam_pallas.1} parent=27 // pred_fallthru
        _
    $region28: #{cbam_pallas.1} parent=5 // pred_fallthru
      _
    %p161 = scmp.le.s32.totalorder 1, %s10
    %p162 = scmp.lt.s32.totalorder %s10, 3
    %p163 = pnand %p161, %p162
    %p164 = pneg %p163
    // Predicated region
    $region33: #{cbam_pallas.1} parent=5 // pred_check
      _
    $region34: #{cbam_pallas.1} parent=5 // pred_check_branch
      %166 = sbr.rel (%p163) target = $region36
    $region35: #{cbam_pallas.1} parent=5 // pred_region
      %s167 = ssub.s32 %s10, 1
      %p168 = scmp.lt.s32.totalorder %s15, 1
      %s169 = scalar_select %p168, %s15, 1
      %s170 = smul.addr %s169, 8
      %s171 = smul.addr %s170, 8
      %s172 = scalar_lea.vmem %s0, %s171
      %p173 = pneg %p36
      %p174 = pneg %p33
      %p175 = pneg %p57
      %p176 = pneg %p54
      %p177 = pneg %p78
      %p178 = pneg %p75
      %p179 = pneg %p99
      %p180 = pneg %p96
      %p181 = pneg %p125
      %p182 = pneg %p122
      %p183 = scmp.lt.s32.totalorder %s15, 1
      %s184 = scalar_select %p183, %s15, 1
      %s185 = smul.addr %s184, 8
      %s186 = smul.addr %s185, 8
      %s187 = scalar_lea.vmem %s4, %s186
      %p188 = scmp.lt.s32.totalorder %s15, 1
      %s189 = scalar_select %p188, %s15, 1
      %s190 = smul.addr %s189, 8
      %s191 = smul.addr %s190, 8
      %s192 = scalar_lea.vmem %s0, %s191
      %p193 = scmp.lt.s32.totalorder %s15, 1
      %s194 = scalar_select %p193, %s15, 1
      %s195 = smul.addr %s194, 8
      %s196 = smul.addr %s195, 8
      %s197 = scalar_lea.vmem %s4, %s196
      %v198 = vld [vmem:[%s192] sm:$0xff]
      %v199 = vld [vmem:[%s192 + $0x8] sm:$0xff]
      %v200 = vld [vmem:[%s192 + $0x10] sm:$0xff]
      %v201 = vld [vmem:[%s192 + $0x18] sm:$0xff]
      %v202 = vld [vmem:[%s192 + $0x20] sm:$0xff]
      %v203 = vld [vmem:[%s192 + $0x28] sm:$0xff]
      %v204 = vld [vmem:[%s192 + $0x30] sm:$0xff]
      %v205 = vld [vmem:[%s192 + $0x38] sm:$0xff]
      %v206 = vadd.f32 %v198, %v199
      %207 = vadd.xlane.f32.xlu0 %v206
      %v208 = vpop.xlane.xlu0 %207
      %v209 = vadd.f32 %v200, %v201
      %210 = vadd.xlane.f32.xlu0 %v209
      %v211 = vpop.xlane.xlu0 %210
      %v212 = vadd.f32 %v202, %v203
      %213 = vadd.xlane.f32.xlu0 %v212
      %v214 = vpop.xlane.xlu0 %213
      %v215 = vadd.f32 %v204, %v205
      %216 = vadd.xlane.f32.xlu0 %v215
      %v217 = vpop.xlane.xlu0 %216
      %v218 = vmul.f32 %v208, 0.00390625
      %v219 = vmul.f32 %v211, 0.00390625
      %v220 = vmul.f32 %v214, 0.00390625
      %v221 = vmul.f32 %v217, 0.00390625
      %v222 = vmax.f32 %v198, %v199
      %223 = vmax.xlane.f32.xlu0 %v222
      %v224 = vpop.xlane.xlu0 %223
      %v225 = vmax.f32 %v200, %v201
      %226 = vmax.xlane.f32.xlu0 %v225
      %v227 = vpop.xlane.xlu0 %226
      %v228 = vmax.f32 %v202, %v203
      %229 = vmax.xlane.f32.xlu0 %v228
      %v230 = vpop.xlane.xlu0 %229
      %v231 = vmax.f32 %v204, %v205
      %232 = vmax.xlane.f32.xlu0 %v231
      %v233 = vpop.xlane.xlu0 %232
      %vm234 = vcmask 7168
      %v235 = vsel %vm234, %v218, %v224
      %v236 = vsel %vm234, %v219, %v227
      %v237 = vsel %vm234, %v220, %v230
      %v238 = vsel %vm234, %v221, %v233
      %v239 = vld [vmem:[%s1] sm:$0x3]
      %vm240 = vcmask 261120
      %v242 = vsel %vm240, %v239, 0
      %244 = vmatprep.subr.mxu0 0.0
      %245 = vmatpush1.msra.mxu0 %v235
      %246 = vmatprep.subr.mxu0 0.0
      %247 = vmatpush1.msra.mxu0 %v236
      %248 = vmatprep.subr.mxu0 0.0
      %249 = vmatpush1.msra.mxu0 %v237
      %250 = vmatprep.subr.mxu0 0.0
      %251 = vmatpush1.msra.mxu0 %v238
      %252 = vmatprep.subr.mxu0 0.0
      %253 = vmatpush1.msra.mxu0 0.0
      %254 = vmatprep.subr.mxu0 0.0
      %255 = vmatpush1.msra.mxu0 0.0
      %256 = vmatprep.subr.mxu0 0.0
      %257 = vmatpush1.msra.mxu0 0.0
      %258 = vmatprep.subr.mxu0 0.0
      %259 = vmatpush1.msra.mxu0 0.0
      %260 = vmatprep.subr.mxu0 0.0
      %261 = vmatpush1.msra.mxu0 0.0
      %262 = vmatprep.subr.mxu0 0.0
      %263 = vmatpush1.msra.mxu0 0.0
      %264 = vmatprep.subr.mxu0 0.0
      %265 = vmatpush1.msra.mxu0 0.0
      %266 = vmatprep.subr.mxu0 0.0
      %267 = vmatpush1.msra.mxu0 0.0
      %268 = vmatprep.subr.mxu0 0.0
      %269 = vmatpush1.msra.mxu0 0.0
      %270 = vmatprep.subr.mxu0 0.0
      %271 = vmatpush1.msra.mxu0 0.0
      %272 = vmatprep.subr.mxu0 0.0
      %273 = vmatpush1.msra.mxu0 0.0
      %274 = vmatprep.subr.mxu0 0.0
      %275 = vmatpush1.msra.mxu0 0.0
      %276 = vmatprep.subr.mxu0 0.0
      %277 = vmatpush1.msra.mxu0 0.0
      %278 = vmatprep.subr.mxu0 0.0
      %279 = vmatpush1.msra.mxu0 0.0
      %280 = vmatprep.subr.mxu0 0.0
      %281 = vmatpush1.msra.mxu0 0.0
      %282 = vmatprep.subr.mxu0 0.0
      %283 = vmatpush1.msra.mxu0 0.0
      %284 = vmatprep.subr.mxu0 0.0
      %285 = vmatpush1.msra.mxu0 0.0
      %286 = vmatprep.subr.mxu0 0.0
      %287 = vmatpush1.msra.mxu0 0.0
      %288 = vmatprep.subr.mxu0 0.0
      %289 = vmatpush1.msra.mxu0 0.0
      %290 = vmatprep.subr.mxu0 0.0
      %291 = vmatpush1.msra.mxu0 0.0
      %292 = vmatprep.subr.mxu0 0.0
      %293 = vmatpush1.msra.mxu0 0.0
      %294 = vmatprep.subr.mxu0 0.0
      %295 = vmatpush1.msra.mxu0 0.0
      %296 = vmatprep.subr.mxu0 0.0
      %297 = vmatpush1.msra.mxu0 0.0
      %298 = vmatprep.subr.mxu0 0.0
      %299 = vmatpush1.msra.mxu0 0.0
      %300 = vmatprep.subr.mxu0 0.0
      %301 = vmatpush1.msra.mxu0 0.0
      %302 = vmatprep.subr.mxu0 0.0
      %303 = vmatpush1.msra.mxu0 0.0
      %304 = vmatprep.subr.mxu0 0.0
      %305 = vmatpush1.msra.mxu0 0.0
      %306 = vmatprep.subr.mxu0 0.0
      %307 = vmatpush1.msra.mxu0 0.0
      %308 = vmatprep.mubr.f32.mxu0 0.0
      %309 = vmatmul.mubr.f32.gmra.mrb[0].mxu0 %v242
      %v310 = vpop.f32.mrb[0].mxu0
      %v311 = vadd.f32 0.0, %v310
      %v312 = vpop.f32.mrb[0].mxu0
      %313 = vdwg.mxu0
      %v314 = vmax.f32 %v311, 0.0
      %v315 = vld [vmem:[%s2] sm:$0xff]
      %v316 = vld [vmem:[%s2 + $0x8] sm:$0xff]
      %v317 = vld [vmem:[%s2 + $0x10] sm:$0xff]
      %v318 = vld [vmem:[%s2 + $0x18] sm:$0xff]
      %vm319 = vcmask 15360
      %v321 = vsel %vm319, %v315, 0
      %v324 = vsel %vm319, %v316, 0
      %v327 = vsel %vm319, %v317, 0
      %v330 = vsel %vm319, %v318, 0
      %vm332 = vcmask 1041408
      %v334 = vsel %vm332, %v314, 0
      %336 = vmatprep.subr.mxu0 0.0
      %337 = vmatpush1.msra.mxu0 %v334
      %338 = vmatprep.subr.mxu0 0.0
      %339 = vmatpush1.msra.mxu0 0.0
      %340 = vmatprep.subr.mxu0 0.0
      %341 = vmatpush1.msra.mxu0 0.0
      %342 = vmatprep.subr.mxu0 0.0
      %343 = vmatpush1.msra.mxu0 0.0
      %344 = vmatprep.subr.mxu0 0.0
      %345 = vmatpush1.msra.mxu0 0.0
      %346 = vmatprep.subr.mxu0 0.0
      %347 = vmatpush1.msra.mxu0 0.0
      %348 = vmatprep.subr.mxu0 0.0
      %349 = vmatpush1.msra.mxu0 0.0
      %350 = vmatprep.subr.mxu0 0.0
      %351 = vmatpush1.msra.mxu0 0.0
      %352 = vmatprep.subr.mxu0 0.0
      %353 = vmatpush1.msra.mxu0 0.0
      %354 = vmatprep.subr.mxu0 0.0
      %355 = vmatpush1.msra.mxu0 0.0
      %356 = vmatprep.subr.mxu0 0.0
      %357 = vmatpush1.msra.mxu0 0.0
      %358 = vmatprep.subr.mxu0 0.0
      %359 = vmatpush1.msra.mxu0 0.0
      %360 = vmatprep.subr.mxu0 0.0
      %361 = vmatpush1.msra.mxu0 0.0
      %362 = vmatprep.subr.mxu0 0.0
      %363 = vmatpush1.msra.mxu0 0.0
      %364 = vmatprep.subr.mxu0 0.0
      %365 = vmatpush1.msra.mxu0 0.0
      %366 = vmatprep.subr.mxu0 0.0
      %367 = vmatpush1.msra.mxu0 0.0
      %368 = vmatprep.subr.mxu0 0.0
      %369 = vmatpush1.msra.mxu0 0.0
      %370 = vmatprep.subr.mxu0 0.0
      %371 = vmatpush1.msra.mxu0 0.0
      %372 = vmatprep.subr.mxu0 0.0
      %373 = vmatpush1.msra.mxu0 0.0
      %374 = vmatprep.subr.mxu0 0.0
      %375 = vmatpush1.msra.mxu0 0.0
      %376 = vmatprep.subr.mxu0 0.0
      %377 = vmatpush1.msra.mxu0 0.0
      %378 = vmatprep.subr.mxu0 0.0
      %379 = vmatpush1.msra.mxu0 0.0
      %380 = vmatprep.subr.mxu0 0.0
      %381 = vmatpush1.msra.mxu0 0.0
      %382 = vmatprep.subr.mxu0 0.0
      %383 = vmatpush1.msra.mxu0 0.0
      %384 = vmatprep.subr.mxu0 0.0
      %385 = vmatpush1.msra.mxu0 0.0
      %386 = vmatprep.subr.mxu0 0.0
      %387 = vmatpush1.msra.mxu0 0.0
      %388 = vmatprep.subr.mxu0 0.0
      %389 = vmatpush1.msra.mxu0 0.0
      %390 = vmatprep.subr.mxu0 0.0
      %391 = vmatpush1.msra.mxu0 0.0
      %392 = vmatprep.subr.mxu0 0.0
      %393 = vmatpush1.msra.mxu0 0.0
      %394 = vmatprep.subr.mxu0 0.0
      %395 = vmatpush1.msra.mxu0 0.0
      %396 = vmatprep.subr.mxu0 0.0
      %397 = vmatpush1.msra.mxu0 0.0
      %398 = vmatprep.subr.mxu0 0.0
      %399 = vmatpush1.msra.mxu0 0.0
      %400 = vmatprep.mubr.f32.mxu0 0.0
      %401 = vmatmul.mubr.f32.gmra.mrb[0].mxu0 %v321
      %v402 = vpop.f32.mrb[0].mxu0
      %v403 = vadd.f32 0.0, %v402
      %v404 = vpop.f32.mrb[0].mxu0
      %405 = vmatprep.mubr.f32.mxu0 0.0
      %406 = vmatmul.mubr.f32.gmra.mrb[0].mxu0 %v324
      %v407 = vpop.f32.mrb[0].mxu0
      %v408 = vadd.f32 0.0, %v407
      %v409 = vpop.f32.mrb[0].mxu0
      %410 = vmatprep.mubr.f32.mxu0 0.0
      %411 = vmatmul.mubr.f32.gmra.mrb[0].mxu0 %v327
      %v412 = vpop.f32.mrb[0].mxu0
      %v413 = vadd.f32 0.0, %v412
      %v414 = vpop.f32.mrb[0].mxu0
      %415 = vmatprep.mubr.f32.mxu0 0.0
      %416 = vmatmul.mubr.f32.gmra.mrb[0].mxu0 %v330
      %v417 = vpop.f32.mrb[0].mxu0
      %v418 = vadd.f32 0.0, %v417
      %v419 = vpop.f32.mrb[0].mxu0
      %420 = vdwg.mxu0
      %425 = vrot.lane.b32.xlu0 %v403, 127
      %v426 = vpop.permute.xlu0 %425
      %427 = vrot.lane.b32.xlu0 %v408, 127
      %v428 = vpop.permute.xlu0 %427
      %429 = vrot.lane.b32.xlu0 %v413, 127
      %v430 = vpop.permute.xlu0 %429
      %431 = vrot.lane.b32.xlu0 %v418, 127
      %v432 = vpop.permute.xlu0 %431
      %v437 = vadd.f32 %v403, %v426
      %v438 = vadd.f32 %v408, %v428
      %v439 = vadd.f32 %v413, %v430
      %v440 = vadd.f32 %v418, %v432
      %v441 = vxor.u32 %v437, 2147483648
      %v442 = vxor.u32 %v438, 2147483648
      %v443 = vxor.u32 %v439, 2147483648
      %v444 = vxor.u32 %v440, 2147483648
      %v445 = vmul.f32 %v441, 1.442695
      %v446 = vpow.pop %v445
      %v447 = vmul.f32 %v442, 1.442695
      %v448 = vpow.pop %v447
      %v449 = vmul.f32 %v443, 1.442695
      %v450 = vpow.pop %v449
      %v451 = vmul.f32 %v444, 1.442695
      %v452 = vpow.pop %v451
      %v453 = vadd.f32 %v446, 1.0
      %v454 = vadd.f32 %v448, 1.0
      %v455 = vadd.f32 %v450, 1.0
      %v456 = vadd.f32 %v452, 1.0
      %v457 = vrcp.pop %v453
      %v458 = vmul.f32 1.0, %v457
      %v459 = vrcp.pop %v454
      %v460 = vmul.f32 1.0, %v459
      %v461 = vrcp.pop %v455
      %v462 = vmul.f32 1.0, %v461
      %v463 = vrcp.pop %v456
      %v464 = vmul.f32 1.0, %v463
      %466 = vset.pattern.permute.xlu0 0
      %467 = vperm.xlu0 %466, %v458
      %v468 = vpop.permute.xlu0 %467
      %471 = vset.pattern.permute.xlu0 0
      %472 = vperm.xlu0 %471, %v460
      %v473 = vpop.permute.xlu0 %472
      %476 = vset.pattern.permute.xlu0 0
      %477 = vperm.xlu0 %476, %v462
      %v478 = vpop.permute.xlu0 %477
      %481 = vset.pattern.permute.xlu0 0
      %482 = vperm.xlu0 %481, %v464
      %v483 = vpop.permute.xlu0 %482
      %v485 = vmul.f32 %v198, %v468
      %v486 = vmul.f32 %v199, %v468
      %v487 = vmul.f32 %v200, %v473
      %v488 = vmul.f32 %v201, %v473
      %v489 = vmul.f32 %v202, %v478
      %v490 = vmul.f32 %v203, %v478
      %v491 = vmul.f32 %v204, %v483
      %v492 = vmul.f32 %v205, %v483
      %v493 = vadd.f32 %v485, %v487
      %v494 = vadd.f32 %v493, %v489
      %v495 = vadd.f32 %v494, %v491
      %v496 = vrot.slane %v495, 4
      %v497 = vadd.f32 %v495, %v496
      %v498 = vrot.slane %v497, 2
      %v499 = vadd.f32 %v497, %v498
      %v500 = vrot.slane %v499, 1
      %v501 = vadd.f32 %v499, %v500
      %v502 = vadd.f32 %v486, %v488
      %v503 = vadd.f32 %v502, %v490
      %v504 = vadd.f32 %v503, %v492
      %v505 = vrot.slane %v504, 4
      %v506 = vadd.f32 %v504, %v505
      %v507 = vrot.slane %v506, 2
      %v508 = vadd.f32 %v506, %v507
      %v509 = vrot.slane %v508, 1
      %v510 = vadd.f32 %v508, %v509
      %v511 = vmul.f32 %v501, 0.03125
      %v512 = vmul.f32 %v510, 0.03125
      %v513 = vmax.f32 %v485, %v489
      %v514 = vmax.f32 %v487, %v491
      %v515 = vmax.f32 %v513, %v514
      %v516 = vrot.slane %v515, 4
      %v517 = vmax.f32 %v515, %v516
      %v518 = vrot.slane %v517, 2
      %v519 = vmax.f32 %v517, %v518
      %v520 = vrot.slane %v519, 1
      %v521 = vmax.f32 %v519, %v520
      %v522 = vmax.f32 %v486, %v490
      %v523 = vmax.f32 %v488, %v492
      %v524 = vmax.f32 %v522, %v523
      %v525 = vrot.slane %v524, 4
      %v526 = vmax.f32 %v524, %v525
      %v527 = vrot.slane %v526, 2
      %v528 = vmax.f32 %v526, %v527
      %v529 = vrot.slane %v528, 1
      %v530 = vmax.f32 %v528, %v529
      %vm531 = vcmask 1040384
      %v532 = vsel %vm531, %v511, %v521
      %v533 = vsel %vm531, %v512, %v530
      %536 = vrot.lane.b32.xlu0 %v532, 51
      %v537 = vpop.permute.xlu0 %536
      %538 = vrot.lane.b32.xlu0 %v533, 51
      %v539 = vpop.permute.xlu0 %538
      %vm540 = vcmask 416768
      %v541 = vsel %vm540, %v537, %v539
      %v545 = vsel %vm540, 0.0, %v537
      %v546 = vsel %vm540, %v539, 0.0
      %v547 = vld [vmem:[%s3] sm:$0x3]
      %v548 = vlaneseq
      %v549 = vand.u32 %v548, 127
      %v550 = vadd.s32 %v549, 128
      %v551 = vand.u32 %v549, 15
      %v552 = vand.u32 %v550, 15
      %554 = vset.pattern.permute.xlu0 0
      %555 = vperm.xlu0 %554, %v547
      %v556 = vpop.permute.xlu0 %555
      %v558 = vmul.f32 %v545, %v556
      %v559 = vmul.f32 %v541, %v556
      %560 = vset.pattern.permute.xlu0 7
      %561 = vperm.xlu0 %560, %v547
      %v562 = vpop.permute.xlu0 %561
      %v564 = vmul.f32 %v545, %v562
      %v565 = vmul.f32 %v541, %v562
      %v566 = vmul.f32 %v546, %v562
      %567 = vset.pattern.permute.xlu0 14
      %568 = vperm.xlu0 %567, %v547
      %v569 = vpop.permute.xlu0 %568
      %v571 = vmul.f32 %v545, %v569
      %v572 = vmul.f32 %v541, %v569
      %v573 = vmul.f32 %v546, %v569
      %574 = vset.pattern.permute.xlu0 21
      %575 = vperm.xlu0 %574, %v547
      %v576 = vpop.permute.xlu0 %575
      %v578 = vmul.f32 %v545, %v576
      %v579 = vmul.f32 %v541, %v576
      %v580 = vmul.f32 %v546, %v576
      %581 = vset.pattern.permute.xlu0 28
      %582 = vperm.xlu0 %581, %v547
      %v583 = vpop.permute.xlu0 %582
      %v585 = vmul.f32 %v545, %v583
      %v586 = vmul.f32 %v541, %v583
      %v587 = vmul.f32 %v546, %v583
      %588 = vset.pattern.permute.xlu0 35
      %589 = vperm.xlu0 %588, %v547
      %v590 = vpop.permute.xlu0 %589
      %v592 = vmul.f32 %v545, %v590
      %v593 = vmul.f32 %v541, %v590
      %v594 = vmul.f32 %v546, %v590
      %595 = vset.pattern.permute.xlu0 42
      %596 = vperm.xlu0 %595, %v547
      %v597 = vpop.permute.xlu0 %596
      %v599 = vmul.f32 %v545, %v597
      %v600 = vmul.f32 %v541, %v597
      %v601 = vmul.f32 %v546, %v597
      %605 = vrot.lane.b32.xlu0 %v564, 112
      %v606 = vpop.permute.xlu0 %605
      %607 = vrot.lane.b32.xlu0 %v565, 112
      %v608 = vpop.permute.xlu0 %607
      %609 = vrot.lane.b32.xlu0 %v566, 112
      %v610 = vpop.permute.xlu0 %609
      %vm611 = vcmask 916480
      %v612 = vsel %vm611, %v606, %v608
      %v613 = vsel %vm611, %v608, %v610
      %v616 = vadd.f32 %v558, %v612
      %v617 = vadd.f32 %v559, %v613
      %621 = vrot.lane.b32.xlu0 %v578, 112
      %v622 = vpop.permute.xlu0 %621
      %623 = vrot.lane.b32.xlu0 %v579, 112
      %v624 = vpop.permute.xlu0 %623
      %625 = vrot.lane.b32.xlu0 %v580, 112
      %v626 = vpop.permute.xlu0 %625
      %v627 = vsel %vm611, %v622, %v624
      %v628 = vsel %vm611, %v624, %v626
      %v632 = vadd.f32 %v571, %v627
      %v633 = vadd.f32 %v572, %v628
      %v634 = vadd.f32 %v573, %v626
      %638 = vrot.lane.b32.xlu0 %v592, 112
      %v639 = vpop.permute.xlu0 %638
      %640 = vrot.lane.b32.xlu0 %v593, 112
      %v641 = vpop.permute.xlu0 %640
      %642 = vrot.lane.b32.xlu0 %v594, 112
      %v643 = vpop.permute.xlu0 %642
      %v644 = vsel %vm611, %v639, %v641
      %v645 = vsel %vm611, %v641, %v643
      %v649 = vadd.f32 %v585, %v644
      %v650 = vadd.f32 %v586, %v645
      %v651 = vadd.f32 %v587, %v643
      %655 = vrot.lane.b32.xlu0 %v632, 96
      %v656 = vpop.permute.xlu0 %655
      %657 = vrot.lane.b32.xlu0 %v633, 96
      %v658 = vpop.permute.xlu0 %657
      %659 = vrot.lane.b32.xlu0 %v634, 96
      %v660 = vpop.permute.xlu0 %659
      %vm661 = vcmask 785408
      %v662 = vsel %vm661, %v656, %v658
      %v663 = vsel %vm661, %v658, %v660
      %v666 = vadd.f32 %v616, %v662
      %v667 = vadd.f32 %v617, %v663
      %671 = vrot.lane.b32.xlu0 %v599, 96
      %v672 = vpop.permute.xlu0 %671
      %673 = vrot.lane.b32.xlu0 %v600, 96
      %v674 = vpop.permute.xlu0 %673
      %675 = vrot.lane.b32.xlu0 %v601, 96
      %v676 = vpop.permute.xlu0 %675
      %v677 = vsel %vm661, %v672, %v674
      %v678 = vsel %vm661, %v674, %v676
      %v682 = vadd.f32 %v649, %v677
      %v683 = vadd.f32 %v650, %v678
      %v684 = vadd.f32 %v651, %v676
      %688 = vrot.lane.b32.xlu0 %v682, 64
      %v689 = vpop.permute.xlu0 %688
      %690 = vrot.lane.b32.xlu0 %v683, 64
      %v691 = vpop.permute.xlu0 %690
      %692 = vrot.lane.b32.xlu0 %v684, 64
      %v693 = vpop.permute.xlu0 %692
      %vm694 = vcmask 523264
      %v695 = vsel %vm694, %v689, %v691
      %v696 = vsel %vm694, %v691, %v693
      %v699 = vadd.f32 %v666, %v695
      %v700 = vadd.f32 %v667, %v696
      %v701 = vadd.s32 %v551, 4294967293
      %v702 = vadd.s32 %v552, 4294967293
      %vm703 = vcmp.ge.s32.totalorder %v701, 0
      %vm704 = vcmp.ge.s32.totalorder %v702, 0
      %vm705 = vcmp.lt.s32.totalorder %v701, 16
      %vm706 = vcmp.lt.s32.totalorder %v702, 16
      %vm707 = vmand %vm703, %vm705
      %vm708 = vmand %vm704, %vm706
      %v709 = vsel %vm707, %v699, 0.0
      %v710 = vsel %vm708, %v700, 0.0
      %711 = vset.pattern.permute.xlu0 1
      %712 = vperm.xlu0 %711, %v547
      %v713 = vpop.permute.xlu0 %712
      %v715 = vmul.f32 %v545, %v713
      %v716 = vmul.f32 %v541, %v713
      %v717 = vmul.f32 %v546, %v713
      %718 = vset.pattern.permute.xlu0 8
      %719 = vperm.xlu0 %718, %v547
      %v720 = vpop.permute.xlu0 %719
      %v722 = vmul.f32 %v545, %v720
      %v723 = vmul.f32 %v541, %v720
      %v724 = vmul.f32 %v546, %v720
      %725 = vset.pattern.permute.xlu0 15
      %726 = vperm.xlu0 %725, %v547
      %v727 = vpop.permute.xlu0 %726
      %v729 = vmul.f32 %v545, %v727
      %v730 = vmul.f32 %v541, %v727
      %v731 = vmul.f32 %v546, %v727
      %732 = vset.pattern.permute.xlu0 22
      %733 = vperm.xlu0 %732, %v547
      %v734 = vpop.permute.xlu0 %733
      %v736 = vmul.f32 %v545, %v734
      %v737 = vmul.f32 %v541, %v734
      %v738 = vmul.f32 %v546, %v734
      %739 = vset.pattern.permute.xlu0 29
      %740 = vperm.xlu0 %739, %v547
      %v741 = vpop.permute.xlu0 %740
      %v743 = vmul.f32 %v545, %v741
      %v744 = vmul.f32 %v541, %v741
      %v745 = vmul.f32 %v546, %v741
      %746 = vset.pattern.permute.xlu0 36
      %747 = vperm.xlu0 %746, %v547
      %v748 = vpop.permute.xlu0 %747
      %v750 = vmul.f32 %v545, %v748
      %v751 = vmul.f32 %v541, %v748
      %v752 = vmul.f32 %v546, %v748
      %753 = vset.pattern.permute.xlu0 43
      %754 = vperm.xlu0 %753, %v547
      %v755 = vpop.permute.xlu0 %754
      %v757 = vmul.f32 %v545, %v755
      %v758 = vmul.f32 %v541, %v755
      %v759 = vmul.f32 %v546, %v755
      %763 = vrot.lane.b32.xlu0 %v722, 112
      %v764 = vpop.permute.xlu0 %763
      %765 = vrot.lane.b32.xlu0 %v723, 112
      %v766 = vpop.permute.xlu0 %765
      %767 = vrot.lane.b32.xlu0 %v724, 112
      %v768 = vpop.permute.xlu0 %767
      %v769 = vsel %vm611, %v764, %v766
      %v770 = vsel %vm611, %v766, %v768
      %v774 = vadd.f32 %v715, %v769
      %v775 = vadd.f32 %v716, %v770
      %v776 = vadd.f32 %v717, %v768
      %780 = vrot.lane.b32.xlu0 %v736, 112
      %v781 = vpop.permute.xlu0 %780
      %782 = vrot.lane.b32.xlu0 %v737, 112
      %v783 = vpop.permute.xlu0 %782
      %784 = vrot.lane.b32.xlu0 %v738, 112
      %v785 = vpop.permute.xlu0 %784
      %v786 = vsel %vm611, %v781, %v783
      %v787 = vsel %vm611, %v783, %v785
      %v791 = vadd.f32 %v729, %v786
      %v792 = vadd.f32 %v730, %v787
      %v793 = vadd.f32 %v731, %v785
      %797 = vrot.lane.b32.xlu0 %v750, 112
      %v798 = vpop.permute.xlu0 %797
      %799 = vrot.lane.b32.xlu0 %v751, 112
      %v800 = vpop.permute.xlu0 %799
      %801 = vrot.lane.b32.xlu0 %v752, 112
      %v802 = vpop.permute.xlu0 %801
      %v803 = vsel %vm611, %v798, %v800
      %v804 = vsel %vm611, %v800, %v802
      %v808 = vadd.f32 %v743, %v803
      %v809 = vadd.f32 %v744, %v804
      %v810 = vadd.f32 %v745, %v802
      %814 = vrot.lane.b32.xlu0 %v791, 96
      %v815 = vpop.permute.xlu0 %814
      %816 = vrot.lane.b32.xlu0 %v792, 96
      %v817 = vpop.permute.xlu0 %816
      %818 = vrot.lane.b32.xlu0 %v793, 96
      %v819 = vpop.permute.xlu0 %818
      %v820 = vsel %vm661, %v815, %v817
      %v821 = vsel %vm661, %v817, %v819
      %v825 = vadd.f32 %v774, %v820
      %v826 = vadd.f32 %v775, %v821
      %v827 = vadd.f32 %v776, %v819
      %831 = vrot.lane.b32.xlu0 %v757, 96
      %v832 = vpop.permute.xlu0 %831
      %833 = vrot.lane.b32.xlu0 %v758, 96
      %v834 = vpop.permute.xlu0 %833
      %835 = vrot.lane.b32.xlu0 %v759, 96
      %v836 = vpop.permute.xlu0 %835
      %v837 = vsel %vm661, %v832, %v834
      %v838 = vsel %vm661, %v834, %v836
      %v842 = vadd.f32 %v808, %v837
      %v843 = vadd.f32 %v809, %v838
      %v844 = vadd.f32 %v810, %v836
      %848 = vrot.lane.b32.xlu0 %v842, 64
      %v849 = vpop.permute.xlu0 %848
      %850 = vrot.lane.b32.xlu0 %v843, 64
      %v851 = vpop.permute.xlu0 %850
      %852 = vrot.lane.b32.xlu0 %v844, 64
      %v853 = vpop.permute.xlu0 %852
      %v854 = vsel %vm694, %v849, %v851
      %v855 = vsel %vm694, %v851, %v853
      %v859 = vadd.f32 %v825, %v854
      %v860 = vadd.f32 %v826, %v855
      %v861 = vadd.f32 %v827, %v853
      %v862 = vadd.s32 %v551, 4294967294
      %v863 = vadd.s32 %v552, 4294967294
      %vm864 = vcmp.ge.s32.totalorder %v862, 0
      %vm865 = vcmp.ge.s32.totalorder %v863, 0
      %vm866 = vcmp.lt.s32.totalorder %v862, 16
      %vm867 = vcmp.lt.s32.totalorder %v863, 16
      %vm868 = vmand %vm864, %vm866
      %vm869 = vmand %vm865, %vm867
      %873 = vrot.lane.b32.xlu0 %v859, 127
      %v874 = vpop.permute.xlu0 %873
      %875 = vrot.lane.b32.xlu0 %v860, 127
      %v876 = vpop.permute.xlu0 %875
      %877 = vrot.lane.b32.xlu0 %v861, 127
      %v878 = vpop.permute.xlu0 %877
      %vm879 = vcmask 1039360
      %v880 = vsel %vm879, %v874, %v876
      %v881 = vsel %vm879, %v876, %v878
      %v884 = vsel %vm868, %v880, 0.0
      %v885 = vsel %vm869, %v881, 0.0
      %886 = vset.pattern.permute.xlu0 2
      %887 = vperm.xlu0 %886, %v547
      %v888 = vpop.permute.xlu0 %887
      %v890 = vmul.f32 %v545, %v888
      %v891 = vmul.f32 %v541, %v888
      %v892 = vmul.f32 %v546, %v888
      %893 = vset.pattern.permute.xlu0 9
      %894 = vperm.xlu0 %893, %v547
      %v895 = vpop.permute.xlu0 %894
      %v897 = vmul.f32 %v545, %v895
      %v898 = vmul.f32 %v541, %v895
      %v899 = vmul.f32 %v546, %v895
      %900 = vset.pattern.permute.xlu0 16
      %901 = vperm.xlu0 %900, %v547
      %v902 = vpop.permute.xlu0 %901
      %v904 = vmul.f32 %v545, %v902
      %v905 = vmul.f32 %v541, %v902
      %v906 = vmul.f32 %v546, %v902
      %907 = vset.pattern.permute.xlu0 23
      %908 = vperm.xlu0 %907, %v547
      %v909 = vpop.permute.xlu0 %908
      %v911 = vmul.f32 %v545, %v909
      %v912 = vmul.f32 %v541, %v909
      %v913 = vmul.f32 %v546, %v909
      %914 = vset.pattern.permute.xlu0 30
      %915 = vperm.xlu0 %914, %v547
      %v916 = vpop.permute.xlu0 %915
      %v918 = vmul.f32 %v545, %v916
      %v919 = vmul.f32 %v541, %v916
      %v920 = vmul.f32 %v546, %v916
      %921 = vset.pattern.permute.xlu0 37
      %922 = vperm.xlu0 %921, %v547
      %v923 = vpop.permute.xlu0 %922
      %v925 = vmul.f32 %v545, %v923
      %v926 = vmul.f32 %v541, %v923
      %v927 = vmul.f32 %v546, %v923
      %928 = vset.pattern.permute.xlu0 44
      %929 = vperm.xlu0 %928, %v547
      %v930 = vpop.permute.xlu0 %929
      %v932 = vmul.f32 %v545, %v930
      %v933 = vmul.f32 %v541, %v930
      %v934 = vmul.f32 %v546, %v930
      %938 = vrot.lane.b32.xlu0 %v897, 112
      %v939 = vpop.permute.xlu0 %938
      %940 = vrot.lane.b32.xlu0 %v898, 112
      %v941 = vpop.permute.xlu0 %940
      %942 = vrot.lane.b32.xlu0 %v899, 112
      %v943 = vpop.permute.xlu0 %942
      %v944 = vsel %vm611, %v939, %v941
      %v945 = vsel %vm611, %v941, %v943
      %v949 = vadd.f32 %v890, %v944
      %v950 = vadd.f32 %v891, %v945
      %v951 = vadd.f32 %v892, %v943
      %955 = vrot.lane.b32.xlu0 %v911, 112
      %v956 = vpop.permute.xlu0 %955
      %957 = vrot.lane.b32.xlu0 %v912, 112
      %v958 = vpop.permute.xlu0 %957
      %959 = vrot.lane.b32.xlu0 %v913, 112
      %v960 = vpop.permute.xlu0 %959
      %v961 = vsel %vm611, %v956, %v958
      %v962 = vsel %vm611, %v958, %v960
      %v966 = vadd.f32 %v904, %v961
      %v967 = vadd.f32 %v905, %v962
      %v968 = vadd.f32 %v906, %v960
      %972 = vrot.lane.b32.xlu0 %v925, 112
      %v973 = vpop.permute.xlu0 %972
      %974 = vrot.lane.b32.xlu0 %v926, 112
      %v975 = vpop.permute.xlu0 %974
      %976 = vrot.lane.b32.xlu0 %v927, 112
      %v977 = vpop.permute.xlu0 %976
      %v978 = vsel %vm611, %v973, %v975
      %v979 = vsel %vm611, %v975, %v977
      %v983 = vadd.f32 %v918, %v978
      %v984 = vadd.f32 %v919, %v979
      %v985 = vadd.f32 %v920, %v977
      %989 = vrot.lane.b32.xlu0 %v966, 96
      %v990 = vpop.permute.xlu0 %989
      %991 = vrot.lane.b32.xlu0 %v967, 96
      %v992 = vpop.permute.xlu0 %991
      %993 = vrot.lane.b32.xlu0 %v968, 96
      %v994 = vpop.permute.xlu0 %993
      %v995 = vsel %vm661, %v990, %v992
      %v996 = vsel %vm661, %v992, %v994
      %v1000 = vadd.f32 %v949, %v995
      %v1001 = vadd.f32 %v950, %v996
      %v1002 = vadd.f32 %v951, %v994
      %1006 = vrot.lane.b32.xlu0 %v932, 96
      %v1007 = vpop.permute.xlu0 %1006
      %1008 = vrot.lane.b32.xlu0 %v933, 96
      %v1009 = vpop.permute.xlu0 %1008
      %1010 = vrot.lane.b32.xlu0 %v934, 96
      %v1011 = vpop.permute.xlu0 %1010
      %v1012 = vsel %vm661, %v1007, %v1009
      %v1013 = vsel %vm661, %v1009, %v1011
      %v1017 = vadd.f32 %v983, %v1012
      %v1018 = vadd.f32 %v984, %v1013
      %v1019 = vadd.f32 %v985, %v1011
      %1023 = vrot.lane.b32.xlu0 %v1017, 64
      %v1024 = vpop.permute.xlu0 %1023
      %1025 = vrot.lane.b32.xlu0 %v1018, 64
      %v1026 = vpop.permute.xlu0 %1025
      %1027 = vrot.lane.b32.xlu0 %v1019, 64
      %v1028 = vpop.permute.xlu0 %1027
      %v1029 = vsel %vm694, %v1024, %v1026
      %v1030 = vsel %vm694, %v1026, %v1028
      %v1034 = vadd.f32 %v1000, %v1029
      %v1035 = vadd.f32 %v1001, %v1030
      %v1036 = vadd.f32 %v1002, %v1028
      %v1037 = vadd.s32 %v551, 4294967295
      %v1038 = vadd.s32 %v552, 4294967295
      %vm1039 = vcmp.ge.s32.totalorder %v1037, 0
      %vm1040 = vcmp.ge.s32.totalorder %v1038, 0
      %vm1041 = vcmp.lt.s32.totalorder %v1037, 16
      %vm1042 = vcmp.lt.s32.totalorder %v1038, 16
      %vm1043 = vmand %vm1039, %vm1041
      %vm1044 = vmand %vm1040, %vm1042
      %1048 = vrot.lane.b32.xlu0 %v1034, 126
      %v1049 = vpop.permute.xlu0 %1048
      %1050 = vrot.lane.b32.xlu0 %v1035, 126
      %v1051 = vpop.permute.xlu0 %1050
      %1052 = vrot.lane.b32.xlu0 %v1036, 126
      %v1053 = vpop.permute.xlu0 %1052
      %vm1054 = vcmask 1031168
      %v1055 = vsel %vm1054, %v1049, %v1051
      %v1056 = vsel %vm1054, %v1051, %v1053
      %v1059 = vsel %vm1043, %v1055, 0.0
      %v1060 = vsel %vm1044, %v1056, 0.0
      %1061 = vset.pattern.permute.xlu0 3
      %1062 = vperm.xlu0 %1061, %v547
      %v1063 = vpop.permute.xlu0 %1062
      %v1065 = vmul.f32 %v545, %v1063
      %v1066 = vmul.f32 %v541, %v1063
      %v1067 = vmul.f32 %v546, %v1063
      %1068 = vset.pattern.permute.xlu0 10
      %1069 = vperm.xlu0 %1068, %v547
      %v1070 = vpop.permute.xlu0 %1069
      %v1072 = vmul.f32 %v545, %v1070
      %v1073 = vmul.f32 %v541, %v1070
      %v1074 = vmul.f32 %v546, %v1070
      %1075 = vset.pattern.permute.xlu0 17
      %1076 = vperm.xlu0 %1075, %v547
      %v1077 = vpop.permute.xlu0 %1076
      %v1079 = vmul.f32 %v545, %v1077
      %v1080 = vmul.f32 %v541, %v1077
      %v1081 = vmul.f32 %v546, %v1077
      %1082 = vset.pattern.permute.xlu0 24
      %1083 = vperm.xlu0 %1082, %v547
      %v1084 = vpop.permute.xlu0 %1083
      %v1086 = vmul.f32 %v545, %v1084
      %v1087 = vmul.f32 %v541, %v1084
      %v1088 = vmul.f32 %v546, %v1084
      %1089 = vset.pattern.permute.xlu0 31
      %1090 = vperm.xlu0 %1089, %v547
      %v1091 = vpop.permute.xlu0 %1090
      %v1093 = vmul.f32 %v545, %v1091
      %v1094 = vmul.f32 %v541, %v1091
      %v1095 = vmul.f32 %v546, %v1091
      %1096 = vset.pattern.permute.xlu0 38
      %1097 = vperm.xlu0 %1096, %v547
      %v1098 = vpop.permute.xlu0 %1097
      %v1100 = vmul.f32 %v545, %v1098
      %v1101 = vmul.f32 %v541, %v1098
      %v1102 = vmul.f32 %v546, %v1098
      %1103 = vset.pattern.permute.xlu0 45
      %1104 = vperm.xlu0 %1103, %v547
      %v1105 = vpop.permute.xlu0 %1104
      %v1107 = vmul.f32 %v545, %v1105
      %v1108 = vmul.f32 %v541, %v1105
      %v1109 = vmul.f32 %v546, %v1105
      %1113 = vrot.lane.b32.xlu0 %v1072, 112
      %v1114 = vpop.permute.xlu0 %1113
      %1115 = vrot.lane.b32.xlu0 %v1073, 112
      %v1116 = vpop.permute.xlu0 %1115
      %1117 = vrot.lane.b32.xlu0 %v1074, 112
      %v1118 = vpop.permute.xlu0 %1117
      %v1119 = vsel %vm611, %v1114, %v1116
      %v1120 = vsel %vm611, %v1116, %v1118
      %v1124 = vadd.f32 %v1065, %v1119
      %v1125 = vadd.f32 %v1066, %v1120
      %v1126 = vadd.f32 %v1067, %v1118
      %1130 = vrot.lane.b32.xlu0 %v1086, 112
      %v1131 = vpop.permute.xlu0 %1130
      %1132 = vrot.lane.b32.xlu0 %v1087, 112
      %v1133 = vpop.permute.xlu0 %1132
      %1134 = vrot.lane.b32.xlu0 %v1088, 112
      %v1135 = vpop.permute.xlu0 %1134
      %v1136 = vsel %vm611, %v1131, %v1133
      %v1137 = vsel %vm611, %v1133, %v1135
      %v1141 = vadd.f32 %v1079, %v1136
      %v1142 = vadd.f32 %v1080, %v1137
      %v1143 = vadd.f32 %v1081, %v1135
      %1147 = vrot.lane.b32.xlu0 %v1100, 112
      %v1148 = vpop.permute.xlu0 %1147
      %1149 = vrot.lane.b32.xlu0 %v1101, 112
      %v1150 = vpop.permute.xlu0 %1149
      %1151 = vrot.lane.b32.xlu0 %v1102, 112
      %v1152 = vpop.permute.xlu0 %1151
      %v1153 = vsel %vm611, %v1148, %v1150
      %v1154 = vsel %vm611, %v1150, %v1152
      %v1158 = vadd.f32 %v1093, %v1153
      %v1159 = vadd.f32 %v1094, %v1154
      %v1160 = vadd.f32 %v1095, %v1152
      %1164 = vrot.lane.b32.xlu0 %v1141, 96
      %v1165 = vpop.permute.xlu0 %1164
      %1166 = vrot.lane.b32.xlu0 %v1142, 96
      %v1167 = vpop.permute.xlu0 %1166
      %1168 = vrot.lane.b32.xlu0 %v1143, 96
      %v1169 = vpop.permute.xlu0 %1168
      %v1170 = vsel %vm661, %v1165, %v1167
      %v1171 = vsel %vm661, %v1167, %v1169
      %v1175 = vadd.f32 %v1124, %v1170
      %v1176 = vadd.f32 %v1125, %v1171
      %v1177 = vadd.f32 %v1126, %v1169
      %1181 = vrot.lane.b32.xlu0 %v1107, 96
      %v1182 = vpop.permute.xlu0 %1181
      %1183 = vrot.lane.b32.xlu0 %v1108, 96
      %v1184 = vpop.permute.xlu0 %1183
      %1185 = vrot.lane.b32.xlu0 %v1109, 96
      %v1186 = vpop.permute.xlu0 %1185
      %v1187 = vsel %vm661, %v1182, %v1184
      %v1188 = vsel %vm661, %v1184, %v1186
      %v1192 = vadd.f32 %v1158, %v1187
      %v1193 = vadd.f32 %v1159, %v1188
      %v1194 = vadd.f32 %v1160, %v1186
      %1198 = vrot.lane.b32.xlu0 %v1192, 64
      %v1199 = vpop.permute.xlu0 %1198
      %1200 = vrot.lane.b32.xlu0 %v1193, 64
      %v1201 = vpop.permute.xlu0 %1200
      %1202 = vrot.lane.b32.xlu0 %v1194, 64
      %v1203 = vpop.permute.xlu0 %1202
      %v1204 = vsel %vm694, %v1199, %v1201
      %v1205 = vsel %vm694, %v1201, %v1203
      %v1209 = vadd.f32 %v1175, %v1204
      %v1210 = vadd.f32 %v1176, %v1205
      %v1211 = vadd.f32 %v1177, %v1203
      %1212 = vset.pattern.permute.xlu0 4
      %1213 = vperm.xlu0 %1212, %v547
      %v1214 = vpop.permute.xlu0 %1213
      %v1216 = vmul.f32 %v545, %v1214
      %v1217 = vmul.f32 %v541, %v1214
      %v1218 = vmul.f32 %v546, %v1214
      %1219 = vset.pattern.permute.xlu0 11
      %1220 = vperm.xlu0 %1219, %v547
      %v1221 = vpop.permute.xlu0 %1220
      %v1223 = vmul.f32 %v545, %v1221
      %v1224 = vmul.f32 %v541, %v1221
      %v1225 = vmul.f32 %v546, %v1221
      %1226 = vset.pattern.permute.xlu0 18
      %1227 = vperm.xlu0 %1226, %v547
      %v1228 = vpop.permute.xlu0 %1227
      %v1230 = vmul.f32 %v545, %v1228
      %v1231 = vmul.f32 %v541, %v1228
      %v1232 = vmul.f32 %v546, %v1228
      %1233 = vset.pattern.permute.xlu0 25
      %1234 = vperm.xlu0 %1233, %v547
      %v1235 = vpop.permute.xlu0 %1234
      %v1237 = vmul.f32 %v545, %v1235
      %v1238 = vmul.f32 %v541, %v1235
      %v1239 = vmul.f32 %v546, %v1235
      %1240 = vset.pattern.permute.xlu0 32
      %1241 = vperm.xlu0 %1240, %v547
      %v1242 = vpop.permute.xlu0 %1241
      %v1244 = vmul.f32 %v545, %v1242
      %v1245 = vmul.f32 %v541, %v1242
      %v1246 = vmul.f32 %v546, %v1242
      %1247 = vset.pattern.permute.xlu0 39
      %1248 = vperm.xlu0 %1247, %v547
      %v1249 = vpop.permute.xlu0 %1248
      %v1251 = vmul.f32 %v545, %v1249
      %v1252 = vmul.f32 %v541, %v1249
      %v1253 = vmul.f32 %v546, %v1249
      %1254 = vset.pattern.permute.xlu0 46
      %1255 = vperm.xlu0 %1254, %v547
      %v1256 = vpop.permute.xlu0 %1255
      %v1258 = vmul.f32 %v545, %v1256
      %v1259 = vmul.f32 %v541, %v1256
      %v1260 = vmul.f32 %v546, %v1256
      %1264 = vrot.lane.b32.xlu0 %v1223, 112
      %v1265 = vpop.permute.xlu0 %1264
      %1266 = vrot.lane.b32.xlu0 %v1224, 112
      %v1267 = vpop.permute.xlu0 %1266
      %1268 = vrot.lane.b32.xlu0 %v1225, 112
      %v1269 = vpop.permute.xlu0 %1268
      %v1270 = vsel %vm611, %v1265, %v1267
      %v1271 = vsel %vm611, %v1267, %v1269
      %v1275 = vadd.f32 %v1216, %v1270
      %v1276 = vadd.f32 %v1217, %v1271
      %v1277 = vadd.f32 %v1218, %v1269
      %1281 = vrot.lane.b32.xlu0 %v1237, 112
      %v1282 = vpop.permute.xlu0 %1281
      %1283 = vrot.lane.b32.xlu0 %v1238, 112
      %v1284 = vpop.permute.xlu0 %1283
      %1285 = vrot.lane.b32.xlu0 %v1239, 112
      %v1286 = vpop.permute.xlu0 %1285
      %v1287 = vsel %vm611, %v1282, %v1284
      %v1288 = vsel %vm611, %v1284, %v1286
      %v1292 = vadd.f32 %v1230, %v1287
      %v1293 = vadd.f32 %v1231, %v1288
      %v1294 = vadd.f32 %v1232, %v1286
      %1298 = vrot.lane.b32.xlu0 %v1251, 112
      %v1299 = vpop.permute.xlu0 %1298
      %1300 = vrot.lane.b32.xlu0 %v1252, 112
      %v1301 = vpop.permute.xlu0 %1300
      %1302 = vrot.lane.b32.xlu0 %v1253, 112
      %v1303 = vpop.permute.xlu0 %1302
      %v1304 = vsel %vm611, %v1299, %v1301
      %v1305 = vsel %vm611, %v1301, %v1303
      %v1309 = vadd.f32 %v1244, %v1304
      %v1310 = vadd.f32 %v1245, %v1305
      %v1311 = vadd.f32 %v1246, %v1303
      %1315 = vrot.lane.b32.xlu0 %v1292, 96
      %v1316 = vpop.permute.xlu0 %1315
      %1317 = vrot.lane.b32.xlu0 %v1293, 96
      %v1318 = vpop.permute.xlu0 %1317
      %1319 = vrot.lane.b32.xlu0 %v1294, 96
      %v1320 = vpop.permute.xlu0 %1319
      %v1321 = vsel %vm661, %v1316, %v1318
      %v1322 = vsel %vm661, %v1318, %v1320
      %v1326 = vadd.f32 %v1275, %v1321
      %v1327 = vadd.f32 %v1276, %v1322
      %v1328 = vadd.f32 %v1277, %v1320
      %1332 = vrot.lane.b32.xlu0 %v1258, 96
      %v1333 = vpop.permute.xlu0 %1332
      %1334 = vrot.lane.b32.xlu0 %v1259, 96
      %v1335 = vpop.permute.xlu0 %1334
      %1336 = vrot.lane.b32.xlu0 %v1260, 96
      %v1337 = vpop.permute.xlu0 %1336
      %v1338 = vsel %vm661, %v1333, %v1335
      %v1339 = vsel %vm661, %v1335, %v1337
      %v1343 = vadd.f32 %v1309, %v1338
      %v1344 = vadd.f32 %v1310, %v1339
      %v1345 = vadd.f32 %v1311, %v1337
      %1349 = vrot.lane.b32.xlu0 %v1343, 64
      %v1350 = vpop.permute.xlu0 %1349
      %1351 = vrot.lane.b32.xlu0 %v1344, 64
      %v1352 = vpop.permute.xlu0 %1351
      %1353 = vrot.lane.b32.xlu0 %v1345, 64
      %v1354 = vpop.permute.xlu0 %1353
      %v1355 = vsel %vm694, %v1350, %v1352
      %v1356 = vsel %vm694, %v1352, %v1354
      %v1360 = vadd.f32 %v1326, %v1355
      %v1361 = vadd.f32 %v1327, %v1356
      %v1362 = vadd.f32 %v1328, %v1354
      %v1363 = vadd.s32 %v551, 1
      %v1364 = vadd.s32 %v552, 1
      %vm1365 = vcmp.ge.s32.totalorder %v1363, 0
      %vm1366 = vcmp.ge.s32.totalorder %v1364, 0
      %vm1367 = vcmp.lt.s32.totalorder %v1363, 16
      %vm1368 = vcmp.lt.s32.totalorder %v1364, 16
      %vm1369 = vmand %vm1365, %vm1367
      %vm1370 = vmand %vm1366, %vm1368
      %1374 = vrot.lane.b32.xlu0 %v1360, 124
      %v1375 = vpop.permute.xlu0 %1374
      %1376 = vrot.lane.b32.xlu0 %v1361, 124
      %v1377 = vpop.permute.xlu0 %1376
      %1378 = vrot.lane.b32.xlu0 %v1362, 124
      %v1379 = vpop.permute.xlu0 %1378
      %vm1380 = vcmask 1014784
      %v1381 = vsel %vm1380, %v1375, %v1377
      %v1382 = vsel %vm1380, %v1377, %v1379
      %v1385 = vsel %vm1369, %v1381, 0.0
      %v1386 = vsel %vm1370, %v1382, 0.0
      %1387 = vset.pattern.permute.xlu0 5
      %1388 = vperm.xlu0 %1387, %v547
      %v1389 = vpop.permute.xlu0 %1388
      %v1391 = vmul.f32 %v545, %v1389
      %v1392 = vmul.f32 %v541, %v1389
      %v1393 = vmul.f32 %v546, %v1389
      %1394 = vset.pattern.permute.xlu0 12
      %1395 = vperm.xlu0 %1394, %v547
      %v1396 = vpop.permute.xlu0 %1395
      %v1398 = vmul.f32 %v545, %v1396
      %v1399 = vmul.f32 %v541, %v1396
      %v1400 = vmul.f32 %v546, %v1396
      %1401 = vset.pattern.permute.xlu0 19
      %1402 = vperm.xlu0 %1401, %v547
      %v1403 = vpop.permute.xlu0 %1402
      %v1405 = vmul.f32 %v545, %v1403
      %v1406 = vmul.f32 %v541, %v1403
      %v1407 = vmul.f32 %v546, %v1403
      %1408 = vset.pattern.permute.xlu0 26
      %1409 = vperm.xlu0 %1408, %v547
      %v1410 = vpop.permute.xlu0 %1409
      %v1412 = vmul.f32 %v545, %v1410
      %v1413 = vmul.f32 %v541, %v1410
      %v1414 = vmul.f32 %v546, %v1410
      %1415 = vset.pattern.permute.xlu0 33
      %1416 = vperm.xlu0 %1415, %v547
      %v1417 = vpop.permute.xlu0 %1416
      %v1419 = vmul.f32 %v545, %v1417
      %v1420 = vmul.f32 %v541, %v1417
      %v1421 = vmul.f32 %v546, %v1417
      %1422 = vset.pattern.permute.xlu0 40
      %1423 = vperm.xlu0 %1422, %v547
      %v1424 = vpop.permute.xlu0 %1423
      %v1426 = vmul.f32 %v545, %v1424
      %v1427 = vmul.f32 %v541, %v1424
      %v1428 = vmul.f32 %v546, %v1424
      %1429 = vset.pattern.permute.xlu0 47
      %1430 = vperm.xlu0 %1429, %v547
      %v1431 = vpop.permute.xlu0 %1430
      %v1433 = vmul.f32 %v545, %v1431
      %v1434 = vmul.f32 %v541, %v1431
      %v1435 = vmul.f32 %v546, %v1431
      %1439 = vrot.lane.b32.xlu0 %v1398, 112
      %v1440 = vpop.permute.xlu0 %1439
      %1441 = vrot.lane.b32.xlu0 %v1399, 112
      %v1442 = vpop.permute.xlu0 %1441
      %1443 = vrot.lane.b32.xlu0 %v1400, 112
      %v1444 = vpop.permute.xlu0 %1443
      %v1445 = vsel %vm611, %v1440, %v1442
      %v1446 = vsel %vm611, %v1442, %v1444
      %v1450 = vadd.f32 %v1391, %v1445
      %v1451 = vadd.f32 %v1392, %v1446
      %v1452 = vadd.f32 %v1393, %v1444
      %1456 = vrot.lane.b32.xlu0 %v1412, 112
      %v1457 = vpop.permute.xlu0 %1456
      %1458 = vrot.lane.b32.xlu0 %v1413, 112
      %v1459 = vpop.permute.xlu0 %1458
      %1460 = vrot.lane.b32.xlu0 %v1414, 112
      %v1461 = vpop.permute.xlu0 %1460
      %v1462 = vsel %vm611, %v1457, %v1459
      %v1463 = vsel %vm611, %v1459, %v1461
      %v1467 = vadd.f32 %v1405, %v1462
      %v1468 = vadd.f32 %v1406, %v1463
      %v1469 = vadd.f32 %v1407, %v1461
      %1473 = vrot.lane.b32.xlu0 %v1426, 112
      %v1474 = vpop.permute.xlu0 %1473
      %1475 = vrot.lane.b32.xlu0 %v1427, 112
      %v1476 = vpop.permute.xlu0 %1475
      %1477 = vrot.lane.b32.xlu0 %v1428, 112
      %v1478 = vpop.permute.xlu0 %1477
      %v1479 = vsel %vm611, %v1474, %v1476
      %v1480 = vsel %vm611, %v1476, %v1478
      %v1484 = vadd.f32 %v1419, %v1479
      %v1485 = vadd.f32 %v1420, %v1480
      %v1486 = vadd.f32 %v1421, %v1478
      %1490 = vrot.lane.b32.xlu0 %v1467, 96
      %v1491 = vpop.permute.xlu0 %1490
      %1492 = vrot.lane.b32.xlu0 %v1468, 96
      %v1493 = vpop.permute.xlu0 %1492
      %1494 = vrot.lane.b32.xlu0 %v1469, 96
      %v1495 = vpop.permute.xlu0 %1494
      %v1496 = vsel %vm661, %v1491, %v1493
      %v1497 = vsel %vm661, %v1493, %v1495
      %v1501 = vadd.f32 %v1450, %v1496
      %v1502 = vadd.f32 %v1451, %v1497
      %v1503 = vadd.f32 %v1452, %v1495
      %1507 = vrot.lane.b32.xlu0 %v1433, 96
      %v1508 = vpop.permute.xlu0 %1507
      %1509 = vrot.lane.b32.xlu0 %v1434, 96
      %v1510 = vpop.permute.xlu0 %1509
      %1511 = vrot.lane.b32.xlu0 %v1435, 96
      %v1512 = vpop.permute.xlu0 %1511
      %v1513 = vsel %vm661, %v1508, %v1510
      %v1514 = vsel %vm661, %v1510, %v1512
      %v1518 = vadd.f32 %v1484, %v1513
      %v1519 = vadd.f32 %v1485, %v1514
      %v1520 = vadd.f32 %v1486, %v1512
      %1524 = vrot.lane.b32.xlu0 %v1518, 64
      %v1525 = vpop.permute.xlu0 %1524
      %1526 = vrot.lane.b32.xlu0 %v1519, 64
      %v1527 = vpop.permute.xlu0 %1526
      %1528 = vrot.lane.b32.xlu0 %v1520, 64
      %v1529 = vpop.permute.xlu0 %1528
      %v1530 = vsel %vm694, %v1525, %v1527
      %v1531 = vsel %vm694, %v1527, %v1529
      %v1535 = vadd.f32 %v1501, %v1530
      %v1536 = vadd.f32 %v1502, %v1531
      %v1537 = vadd.f32 %v1503, %v1529
      %v1538 = vadd.s32 %v551, 2
      %v1539 = vadd.s32 %v552, 2
      %vm1540 = vcmp.ge.s32.totalorder %v1538, 0
      %vm1541 = vcmp.ge.s32.totalorder %v1539, 0
      %vm1542 = vcmp.lt.s32.totalorder %v1538, 16
      %vm1543 = vcmp.lt.s32.totalorder %v1539, 16
      %vm1544 = vmand %vm1540, %vm1542
      %vm1545 = vmand %vm1541, %vm1543
      %1549 = vrot.lane.b32.xlu0 %v1535, 123
      %v1550 = vpop.permute.xlu0 %1549
      %1551 = vrot.lane.b32.xlu0 %v1536, 123
      %v1552 = vpop.permute.xlu0 %1551
      %1553 = vrot.lane.b32.xlu0 %v1537, 123
      %v1554 = vpop.permute.xlu0 %1553
      %vm1555 = vcmask 1006592
      %v1556 = vsel %vm1555, %v1550, %v1552
      %v1557 = vsel %vm1555, %v1552, %v1554
      %v1560 = vsel %vm1544, %v1556, 0.0
      %v1561 = vsel %vm1545, %v1557, 0.0
      %1562 = vset.pattern.permute.xlu0 6
      %1563 = vperm.xlu0 %1562, %v547
      %v1564 = vpop.permute.xlu0 %1563
      %v1566 = vmul.f32 %v545, %v1564
      %v1567 = vmul.f32 %v541, %v1564
      %v1568 = vmul.f32 %v546, %v1564
      %1569 = vset.pattern.permute.xlu0 13
      %1570 = vperm.xlu0 %1569, %v547
      %v1571 = vpop.permute.xlu0 %1570
      %v1573 = vmul.f32 %v545, %v1571
      %v1574 = vmul.f32 %v541, %v1571
      %v1575 = vmul.f32 %v546, %v1571
      %1576 = vset.pattern.permute.xlu0 20
      %1577 = vperm.xlu0 %1576, %v547
      %v1578 = vpop.permute.xlu0 %1577
      %v1580 = vmul.f32 %v545, %v1578
      %v1581 = vmul.f32 %v541, %v1578
      %v1582 = vmul.f32 %v546, %v1578
      %1583 = vset.pattern.permute.xlu0 27
      %1584 = vperm.xlu0 %1583, %v547
      %v1585 = vpop.permute.xlu0 %1584
      %v1587 = vmul.f32 %v545, %v1585
      %v1588 = vmul.f32 %v541, %v1585
      %v1589 = vmul.f32 %v546, %v1585
      %1590 = vset.pattern.permute.xlu0 34
      %1591 = vperm.xlu0 %1590, %v547
      %v1592 = vpop.permute.xlu0 %1591
      %v1594 = vmul.f32 %v545, %v1592
      %v1595 = vmul.f32 %v541, %v1592
      %v1596 = vmul.f32 %v546, %v1592
      %1597 = vset.pattern.permute.xlu0 41
      %1598 = vperm.xlu0 %1597, %v547
      %v1599 = vpop.permute.xlu0 %1598
      %v1601 = vmul.f32 %v545, %v1599
      %v1602 = vmul.f32 %v541, %v1599
      %v1603 = vmul.f32 %v546, %v1599
      %1604 = vset.pattern.permute.xlu0 48
      %1605 = vperm.xlu0 %1604, %v547
      %v1606 = vpop.permute.xlu0 %1605
      %v1608 = vmul.f32 %v545, %v1606
      %v1609 = vmul.f32 %v541, %v1606
      %v1610 = vmul.f32 %v546, %v1606
      %1614 = vrot.lane.b32.xlu0 %v1573, 112
      %v1615 = vpop.permute.xlu0 %1614
      %1616 = vrot.lane.b32.xlu0 %v1574, 112
      %v1617 = vpop.permute.xlu0 %1616
      %1618 = vrot.lane.b32.xlu0 %v1575, 112
      %v1619 = vpop.permute.xlu0 %1618
      %v1620 = vsel %vm611, %v1615, %v1617
      %v1621 = vsel %vm611, %v1617, %v1619
      %v1625 = vadd.f32 %v1566, %v1620
      %v1626 = vadd.f32 %v1567, %v1621
      %v1627 = vadd.f32 %v1568, %v1619
      %1631 = vrot.lane.b32.xlu0 %v1587, 112
      %v1632 = vpop.permute.xlu0 %1631
      %1633 = vrot.lane.b32.xlu0 %v1588, 112
      %v1634 = vpop.permute.xlu0 %1633
      %1635 = vrot.lane.b32.xlu0 %v1589, 112
      %v1636 = vpop.permute.xlu0 %1635
      %v1637 = vsel %vm611, %v1632, %v1634
      %v1638 = vsel %vm611, %v1634, %v1636
      %v1642 = vadd.f32 %v1580, %v1637
      %v1643 = vadd.f32 %v1581, %v1638
      %v1644 = vadd.f32 %v1582, %v1636
      %1648 = vrot.lane.b32.xlu0 %v1601, 112
      %v1649 = vpop.permute.xlu0 %1648
      %1650 = vrot.lane.b32.xlu0 %v1602, 112
      %v1651 = vpop.permute.xlu0 %1650
      %1652 = vrot.lane.b32.xlu0 %v1603, 112
      %v1653 = vpop.permute.xlu0 %1652
      %v1654 = vsel %vm611, %v1649, %v1651
      %v1655 = vsel %vm611, %v1651, %v1653
      %v1659 = vadd.f32 %v1594, %v1654
      %v1660 = vadd.f32 %v1595, %v1655
      %v1661 = vadd.f32 %v1596, %v1653
      %1665 = vrot.lane.b32.xlu0 %v1642, 96
      %v1666 = vpop.permute.xlu0 %1665
      %1667 = vrot.lane.b32.xlu0 %v1643, 96
      %v1668 = vpop.permute.xlu0 %1667
      %1669 = vrot.lane.b32.xlu0 %v1644, 96
      %v1670 = vpop.permute.xlu0 %1669
      %v1671 = vsel %vm661, %v1666, %v1668
      %v1672 = vsel %vm661, %v1668, %v1670
      %v1676 = vadd.f32 %v1625, %v1671
      %v1677 = vadd.f32 %v1626, %v1672
      %v1678 = vadd.f32 %v1627, %v1670
      %1682 = vrot.lane.b32.xlu0 %v1608, 96
      %v1683 = vpop.permute.xlu0 %1682
      %1684 = vrot.lane.b32.xlu0 %v1609, 96
      %v1685 = vpop.permute.xlu0 %1684
      %1686 = vrot.lane.b32.xlu0 %v1610, 96
      %v1687 = vpop.permute.xlu0 %1686
      %v1688 = vsel %vm661, %v1683, %v1685
      %v1689 = vsel %vm661, %v1685, %v1687
      %v1693 = vadd.f32 %v1659, %v1688
      %v1694 = vadd.f32 %v1660, %v1689
      %v1695 = vadd.f32 %v1661, %v1687
      %1699 = vrot.lane.b32.xlu0 %v1693, 64
      %v1700 = vpop.permute.xlu0 %1699
      %1701 = vrot.lane.b32.xlu0 %v1694, 64
      %v1702 = vpop.permute.xlu0 %1701
      %1703 = vrot.lane.b32.xlu0 %v1695, 64
      %v1704 = vpop.permute.xlu0 %1703
      %v1705 = vsel %vm694, %v1700, %v1702
      %v1706 = vsel %vm694, %v1702, %v1704
      %v1710 = vadd.f32 %v1676, %v1705
      %v1711 = vadd.f32 %v1677, %v1706
      %v1712 = vadd.f32 %v1678, %v1704
      %v1713 = vadd.s32 %v551, 3
      %v1714 = vadd.s32 %v552, 3
      %vm1715 = vcmp.ge.s32.totalorder %v1713, 0
      %vm1716 = vcmp.ge.s32.totalorder %v1714, 0
      %vm1717 = vcmp.lt.s32.totalorder %v1713, 16
      %vm1718 = vcmp.lt.s32.totalorder %v1714, 16
      %vm1719 = vmand %vm1715, %vm1717
      %vm1720 = vmand %vm1716, %vm1718
      %1724 = vrot.lane.b32.xlu0 %v1710, 122
      %v1725 = vpop.permute.xlu0 %1724
      %1726 = vrot.lane.b32.xlu0 %v1711, 122
      %v1727 = vpop.permute.xlu0 %1726
      %1728 = vrot.lane.b32.xlu0 %v1712, 122
      %v1729 = vpop.permute.xlu0 %1728
      %vm1730 = vcmask 998400
      %v1731 = vsel %vm1730, %v1725, %v1727
      %v1732 = vsel %vm1730, %v1727, %v1729
      %v1735 = vsel %vm1719, %v1731, 0.0
      %v1736 = vsel %vm1720, %v1732, 0.0
      %v1737 = vadd.f32 %v709, %v884
      %v1738 = vadd.f32 %v710, %v885
      %1742 = vrot.lane.b32.xlu0 %v1209, 125
      %v1743 = vpop.permute.xlu0 %1742
      %1744 = vrot.lane.b32.xlu0 %v1210, 125
      %v1745 = vpop.permute.xlu0 %1744
      %1746 = vrot.lane.b32.xlu0 %v1211, 125
      %v1747 = vpop.permute.xlu0 %1746
      %vm1748 = vcmask 1022976
      %v1749 = vsel %vm1748, %v1743, %v1745
      %v1750 = vsel %vm1748, %v1745, %v1747
      %v1753 = vadd.f32 %v1059, %v1749
      %v1754 = vadd.f32 %v1060, %v1750
      %v1755 = vadd.f32 %v1385, %v1560
      %v1756 = vadd.f32 %v1386, %v1561
      %v1757 = vadd.f32 %v1737, %v1753
      %v1758 = vadd.f32 %v1738, %v1754
      %v1759 = vadd.f32 %v1755, %v1735
      %v1760 = vadd.f32 %v1756, %v1736
      %v1761 = vadd.f32 %v1757, %v1759
      %v1762 = vadd.f32 %v1758, %v1760
      %v1763 = vsel %vm332, %v1761, 0.0
      %v1764 = vrot.slane %v1763, 4
      %v1765 = vadd.f32 %v1763, %v1764
      %v1766 = vrot.slane %v1765, 2
      %v1767 = vadd.f32 %v1765, %v1766
      %v1768 = vrot.slane %v1767, 1
      %v1769 = vadd.f32 %v1767, %v1768
      %v1770 = vsel %vm332, %v1762, 0.0
      %v1771 = vrot.slane %v1770, 4
      %v1772 = vadd.f32 %v1770, %v1771
      %v1773 = vrot.slane %v1772, 2
      %v1774 = vadd.f32 %v1772, %v1773
      %v1775 = vrot.slane %v1774, 1
      %v1776 = vadd.f32 %v1774, %v1775
      %v1777 = vxor.u32 %v1769, 2147483648
      %v1778 = vxor.u32 %v1776, 2147483648
      %v1779 = vmul.f32 %v1777, 1.442695
      %v1780 = vpow.pop %v1779
      %v1781 = vmul.f32 %v1778, 1.442695
      %v1782 = vpow.pop %v1781
      %v1783 = vadd.f32 %v1780, 1.0
      %v1784 = vadd.f32 %v1782, 1.0
      %v1785 = vrcp.pop %v1783
      %v1786 = vmul.f32 1.0, %v1785
      %v1787 = vrcp.pop %v1784
      %v1788 = vmul.f32 1.0, %v1787
      %v1789 = vmul.f32 %v485, %v1786
      %v1790 = vmul.f32 %v486, %v1788
      %v1791 = vmul.f32 %v487, %v1786
      %v1792 = vmul.f32 %v488, %v1788
      %v1793 = vmul.f32 %v489, %v1786
      %v1794 = vmul.f32 %v490, %v1788
      %v1795 = vmul.f32 %v491, %v1786
      %v1796 = vmul.f32 %v492, %v1788
      %1797 = vst [vmem:[%s197] sm:$0xff] %v1789
      %1798 = vst [vmem:[%s197 + $0x8] sm:$0xff] %v1790
      %1799 = vst [vmem:[%s197 + $0x10] sm:$0xff] %v1791
      %1800 = vst [vmem:[%s197 + $0x18] sm:$0xff] %v1792
      %1801 = vst [vmem:[%s197 + $0x20] sm:$0xff] %v1793
      %1802 = vst [vmem:[%s197 + $0x28] sm:$0xff] %v1794
      %1803 = vst [vmem:[%s197 + $0x30] sm:$0xff] %v1795
      %1804 = vst [vmem:[%s197 + $0x38] sm:$0xff] %v1796
      %p1805 = scmp.lt.s32.totalorder %s15, 1
      %s1806 = scalar_select %p1805, %s15, 1
      %s1807 = smul.addr %s1806, 8
      %s1808 = smul.addr %s1807, 8
      %s1809 = scalar_lea.vmem %s4, %s1808
      // Predicated region
      $region37: #{cbam_pallas.1} parent=35 // pred_check
        %p1810 = pneg %p122
      $region38: #{cbam_pallas.1} parent=35 // pred_check_branch
        %1812 = sbr.rel (%p1810) target = $region40
      $region39: #{cbam_pallas.1} parent=35 // pred_region
        _
      $region40: #{cbam_pallas.1} parent=35 // pred_fallthru
        _
    $region36: #{cbam_pallas.1} parent=5 // pred_fallthru
      _
    %p1813 = scmp.le.s32.totalorder 2, %s10
    // Predicated region
    $region41: #{cbam_pallas.1} parent=5 // pred_check
      %p1814 = pneg %p1813
    $region42: #{cbam_pallas.1} parent=5 // pred_check_branch
      %1816 = sbr.rel (%p1814) target = $region44
    $region43: #{cbam_pallas.1} parent=5 // pred_region
      %s1817 = ssub.s32 %s10, 2
      // Predicated region
      $region45: #{cbam_pallas.1} parent=43 // pred_check
        %p1818 = pneg %p128
      $region46: #{cbam_pallas.1} parent=43 // pred_check_branch
        %1820 = sbr.rel (%p1818) target = $region48
      $region47: #{cbam_pallas.1} parent=43 // pred_region
        %p1821 = scmp.lt.s32.totalorder %s16, 1
        %s1822 = scalar_select %p1821, %s16, 1
        %s1823 = smul.addr %s1822, 8
        %s1824 = smul.addr %s1823, 8
        %s1825 = scalar_lea.vmem %s4, %s1824
      $region48: #{cbam_pallas.1} parent=43 // pred_fallthru
        _
    $region44: #{cbam_pallas.1} parent=5 // pred_fallthru
      _
  $region6: #{cbam_pallas.1} parent=0 // loop_footer
    %s14 = sadd.s32 1, %s10
  $region7: #{cbam_pallas.1} parent=0 // loop_footer_branch
    %9 = sbr.rel target = $region3
  $region8: #{cbam_pallas.1} parent=0 // loop_exit
    _

</llo_original>
